<compile_context>
chip_gen: v6e
topology: v6e:2x2x1
jax: 0.10.0
libtpu: 0.0.40
codegen_flags: <defaults>
</compile_context>

<pallas_src>
import functools

import jax
import jax.numpy as jnp
from jax.experimental import pallas as pl
from jax.experimental.pallas import tpu as pltpu


def _round_up(n: int, m: int) -> int:
    return ((n + m - 1) // m) * m


def _critic_kernel(*args, num_segments):
    """One batch tile of the fused Critic MLP in transposed orientation.

    The batch dimension lives on the 128-lane axis: intermediates are
    (64, block_b)/(32, block_b) and the output block is a lane-dense
    (1, block_b) row.
    """
    x_refs = args[:num_segments]
    w1_refs = args[num_segments:2 * num_segments]
    (b1_ref, w2_ref, b2_ref, w3_ref, b3_ref,
     w4_ref, b4_ref, o_ref) = args[2 * num_segments:]

    def f32(v):
        return v if v.dtype == jnp.float32 else v.astype(jnp.float32)

    # fc1: concat(state..., action...) @ W1^T is fused as per-segment partial
    # matmuls against the row-split of W1 -- no concatenated x ever exists.
    #   h1[o, b] = sum_seg sum_f w1_seg[o, f] * x_seg[b, f]
    contract_feature = (((1,), (1,)), ((), ()))      # A @ B^T  (batch -> lanes)
    acc = None
    for x_ref, w_ref in zip(x_refs, w1_refs):
        part = jax.lax.dot_general(
            f32(w_ref[...]), f32(x_ref[...]), contract_feature,
            preferred_element_type=jnp.float32)
        acc = part if acc is None else acc + part

    h = jnp.maximum(acc + b1_ref[...], 0.0)                        # (64, Bb)
    h = jnp.maximum(
        jnp.dot(w2_ref[...], h, preferred_element_type=jnp.float32)
        + b2_ref[...], 0.0)                                        # (64, Bb)
    h = jnp.maximum(
        jnp.dot(w3_ref[...], h, preferred_element_type=jnp.float32)
        + b3_ref[...], 0.0)                                        # (32, Bb)
    # q_out: (1,32)@(32,Bb) as broadcast-multiply + sublane reduction.
    q = jnp.sum(w4_ref[...] * h, axis=0, keepdims=True) + b4_ref[...]   # (1, Bb)
    o_ref[...] = q.astype(o_ref.dtype)


def critic_forward(state_list, action_list, params, *,
                   block_b: int = 2048, x_dtype=jnp.float32):
    """MADDPG Critic forward.

    state_list / action_list: sequences of (B, obs_i) / (B, act_i) arrays.
    params: dict with w1..w4 of shape (out, in) and b1..b4 of shape (out, 1)
            (PyTorch nn.Linear layout for weights), f32.
    Returns (B, 1) f32 Q-values.
    """
    segments = [jnp.asarray(s) for s in state_list] + \
               [jnp.asarray(a) for a in action_list]
    num_segments = len(segments)
    B = int(segments[0].shape[0])
    feats = [int(s.shape[1]) for s in segments]
    in_dim = sum(feats)

    w1 = params["w1"]
    assert w1.shape == (64, in_dim), (w1.shape, in_dim)

    # ---- batch tile selection --------------------------------------------
    itemsize = jnp.dtype(x_dtype).itemsize
    # Crude VMEM cost per batch row: double-buffered x tiles (lane-padded to
    # 128 lanes per segment) plus a few (64, block_b) f32 intermediates.
    per_row = 2 * num_segments * 128 * itemsize + 6 * 64 * 4
    vmem_cap_rows = max(128, ((20 * 1024 * 1024) // per_row) // 128 * 128)

    block_b = _round_up(max(int(block_b), 128), 128)
    half_b = _round_up(max((B + 1) // 2, 1), 128)     # keep grid_b >= 2 for big B (v7x)
    block_b = max(128, min(block_b, half_b, vmem_cap_rows))
    padded_b = _round_up(max(B, 1), block_b)
    grid_b = padded_b // block_b

    # ---- inputs: per-segment, batch-padded, optionally bf16 ---------------
    xs = []
    for s in segments:
        s = s.astype(x_dtype)
        if padded_b != B:
            s = jnp.pad(s, ((0, padded_b - B), (0, 0)))
        xs.append(s)

    # Row-split of w1 matching the (never materialized) concat layout.
    w1_segs = []
    off = 0
    for f in feats:
        w1_segs.append(w1[:, off:off + f])
        off += f

    w4_col = params["w4"].reshape(32, 1)       # (1,32) -> (32,1) column
    b4 = params["b4"].reshape(1, 1)

    kernel = functools.partial(_critic_kernel, num_segments=num_segments)

    # Full-array VMEM residency for the (tiny) weights/biases; batch-tiled
    # specs for the per-segment activations; lane-dense output blocks.
    weight_spec = pl.BlockSpec(memory_space=pltpu.VMEM)
    in_specs = (
        [pl.BlockSpec((block_b, f), lambda i: (i, 0)) for f in feats]
        + [weight_spec] * num_segments           # w1 segments
        + [weight_spec] * 7                      # b1, w2, b2, w3, b3, w4, b4
    )
    out_spec = pl.BlockSpec((1, block_b), lambda i: (0, i))

    out = pl.pallas_call(
        kernel,
        out_shape=jax.ShapeDtypeStruct((1, padded_b), jnp.float32),
        grid=(grid_b,),
        in_specs=in_specs,
        out_specs=out_spec,
        compiler_params=pltpu.CompilerParams(
            # Batch tiles are independent -> megacore-shardable on v7x.
            dimension_semantics=("parallel",),
            # Larger tiles than the v5e 16 MiB default comfortably allows.
            vmem_limit_bytes=32 * 1024 * 1024),
    )(*xs, *w1_segs,
      params["b1"], params["w2"], params["b2"],
      params["w3"], params["b3"], w4_col, b4)

    return out[0, :B].reshape(B, 1)


def init_critic_params(key, in_dim):
    """PyTorch nn.Linear default init: uniform(-1/sqrt(fan_in), 1/sqrt(fan_in)).

    Weights stored as (out_features, in_features) (same as torch), biases as
    (out_features, 1) so they broadcast along lanes in the transposed kernel.
    """
    dims = [(in_dim, 64), (64, 64), (64, 32), (32, 1)]
    params = {}
    for idx, (fan_in, fan_out) in enumerate(dims, start=1):
        key, kw, kb = jax.random.split(key, 3)
        bound = 1.0 / (fan_in ** 0.5)
        params[f"w{idx}"] = jax.random.uniform(
            kw, (fan_out, fan_in), jnp.float32, -bound, bound)
        params[f"b{idx}"] = jax.random.uniform(
            kb, (fan_out, 1), jnp.float32, -bound, bound)
    return params


def critic_ref(state_list, action_list, params):
    """Pure-JAX reference (high-precision matmuls) for correctness checking."""
    x = jnp.concatenate(list(state_list) + list(action_list), axis=1)
    hp = jax.lax.Precision.HIGHEST

    def lin(h, w, b):
        return jnp.dot(h, w.T, precision=hp) + b.T

    h = jax.nn.relu(lin(x, params["w1"], params["b1"]))
    h = jax.nn.relu(lin(h, params["w2"], params["b2"]))
    h = jax.nn.relu(lin(h, params["w3"], params["b3"]))
    return lin(h, params["w4"], params["b4"])


if __name__ == "__main__":
    key = jax.random.PRNGKey(0)

    # Small MADDPG setup: 3 agents, obs_shape=[16,16,16], action_shape=[8,8,8].
    B = 2
    obs_shape = (16, 16, 16)
    action_shape = (8, 8, 8)
    in_dim = sum(obs_shape) + sum(action_shape)   # 72

    keys = jax.random.split(key, len(obs_shape) + len(action_shape) + 1)
    kp, data_keys = keys[0], keys[1:]
    states = [jax.random.normal(data_keys[i], (B, d), jnp.float32)
              for i, d in enumerate(obs_shape)]
    actions = [jax.random.normal(data_keys[len(obs_shape) + i], (B, d), jnp.float32)
               for i, d in enumerate(action_shape)]
    params = init_critic_params(kp, in_dim)

    ref = critic_ref(states, actions, params)

    # --- small-batch run (f32 inputs) ---
    q = jax.block_until_ready(critic_forward(states, actions, params))
    assert q.shape == (B, 1)
    # Tolerance covers XLA-vs-Mosaic default matmul precision differences.
    assert jnp.allclose(q, ref, atol=2e-2, rtol=2e-2), "mismatch vs reference (f32)"

    # --- bf16-shipped inputs (halves the dominant HBM stream) ---
    q_bf16 = jax.block_until_ready(
        critic_forward(states, actions, params, x_dtype=jnp.bfloat16))
    assert jnp.allclose(q_bf16, ref, atol=1e-1, rtol=1e-1), "mismatch vs reference (bf16)"

    # --- larger batch: exercises the batch-tile grid with grid_b >= 2 ---
    BIG = 512
    big_keys = jax.random.split(jax.random.PRNGKey(1),
                                len(obs_shape) + len(action_shape))
    big_states = [jax.random.normal(big_keys[i], (BIG, d), jnp.float32)
                  for i, d in enumerate(obs_shape)]
    big_actions = [jax.random.normal(big_keys[len(obs_shape) + i], (BIG, d), jnp.float32)
                   for i, d in enumerate(action_shape)]
    q_big = jax.block_until_ready(critic_forward(big_states, big_actions, params))
    ref_big = critic_ref(big_states, big_actions, params)
    assert q_big.shape == (BIG, 1)
    assert jnp.allclose(q_big, ref_big, atol=2e-2, rtol=2e-2), \
        "mismatch vs reference (big batch)"

    print("KERNEL_OK")
</pallas_src>

<mosaic_0001>
module attributes {stable_mosaic.version = 11 : i64} {
  func.func @_critic_kernel(%arg0: i32, %arg1: memref<128x16xf32, #tpu.memory_space<vmem>>, %arg2: memref<128x16xf32, #tpu.memory_space<vmem>>, %arg3: memref<128x16xf32, #tpu.memory_space<vmem>>, %arg4: memref<128x8xf32, #tpu.memory_space<vmem>>, %arg5: memref<128x8xf32, #tpu.memory_space<vmem>>, %arg6: memref<128x8xf32, #tpu.memory_space<vmem>>, %arg7: memref<64x16xf32, #tpu.memory_space<vmem>>, %arg8: memref<64x16xf32, #tpu.memory_space<vmem>>, %arg9: memref<64x16xf32, #tpu.memory_space<vmem>>, %arg10: memref<64x8xf32, #tpu.memory_space<vmem>>, %arg11: memref<64x8xf32, #tpu.memory_space<vmem>>, %arg12: memref<64x8xf32, #tpu.memory_space<vmem>>, %arg13: memref<64x1xf32, #tpu.memory_space<vmem>>, %arg14: memref<64x64xf32, #tpu.memory_space<vmem>>, %arg15: memref<64x1xf32, #tpu.memory_space<vmem>>, %arg16: memref<32x64xf32, #tpu.memory_space<vmem>>, %arg17: memref<32x1xf32, #tpu.memory_space<vmem>>, %arg18: memref<32x1xf32, #tpu.memory_space<vmem>>, %arg19: memref<1x1xf32, #tpu.memory_space<vmem>>, %arg20: memref<1x128xf32, #tpu.memory_space<vmem>>) attributes {dimension_semantics = [#tpu.dimension_semantics<parallel>], iteration_bounds = array<i64: 1>, scalar_prefetch = 0 : i64, scratch_operands = 0 : i64, tpu.core_type = #tpu.core_type<tc>, window_params = [{transform_indices = @transform_0, window_bounds = array<i64: 128, 16>}, {transform_indices = @transform_1, window_bounds = array<i64: 128, 16>}, {transform_indices = @transform_2, window_bounds = array<i64: 128, 16>}, {transform_indices = @transform_3, window_bounds = array<i64: 128, 8>}, {transform_indices = @transform_4, window_bounds = array<i64: 128, 8>}, {transform_indices = @transform_5, window_bounds = array<i64: 128, 8>}, {pipeline_mode = #tpu.pipeline_mode<synchronous>, transform_indices = @transform_6, window_bounds = array<i64: 64, 16>}, {pipeline_mode = #tpu.pipeline_mode<synchronous>, transform_indices = @transform_7, window_bounds = array<i64: 64, 16>}, {pipeline_mode = #tpu.pipeline_mode<synchronous>, transform_indices = @transform_8, window_bounds = array<i64: 64, 16>}, {pipeline_mode = #tpu.pipeline_mode<synchronous>, transform_indices = @transform_9, window_bounds = array<i64: 64, 8>}, {pipeline_mode = #tpu.pipeline_mode<synchronous>, transform_indices = @transform_10, window_bounds = array<i64: 64, 8>}, {pipeline_mode = #tpu.pipeline_mode<synchronous>, transform_indices = @transform_11, window_bounds = array<i64: 64, 8>}, {pipeline_mode = #tpu.pipeline_mode<synchronous>, transform_indices = @transform_12, window_bounds = array<i64: 64, 1>}, {pipeline_mode = #tpu.pipeline_mode<synchronous>, transform_indices = @transform_13, window_bounds = array<i64: 64, 64>}, {pipeline_mode = #tpu.pipeline_mode<synchronous>, transform_indices = @transform_14, window_bounds = array<i64: 64, 1>}, {pipeline_mode = #tpu.pipeline_mode<synchronous>, transform_indices = @transform_15, window_bounds = array<i64: 32, 64>}, {pipeline_mode = #tpu.pipeline_mode<synchronous>, transform_indices = @transform_16, window_bounds = array<i64: 32, 1>}, {pipeline_mode = #tpu.pipeline_mode<synchronous>, transform_indices = @transform_17, window_bounds = array<i64: 32, 1>}, {pipeline_mode = #tpu.pipeline_mode<synchronous>, transform_indices = @transform_18, window_bounds = array<i64: 1, 1>}, {transform_indices = @transform_19, window_bounds = array<i64: 1, 128>}]} {
    %c0 = arith.constant 0 : index
    %c0_0 = arith.constant 0 : index
    %0 = vector.load %arg7[%c0, %c0_0] : memref<64x16xf32, #tpu.memory_space<vmem>>, vector<64x16xf32>
    %c0_1 = arith.constant 0 : index
    %c0_2 = arith.constant 0 : index
    %1 = vector.load %arg1[%c0_1, %c0_2] : memref<128x16xf32, #tpu.memory_space<vmem>>, vector<128x16xf32>
    %cst = arith.constant dense<0.000000e+00> : vector<64x128xf32>
    %2 = tpu.matmul %0, %1, %cst {dimension_numbers = #tpu.dot_dimension_numbers<[1], [1], [0], [0], [0, 0, 1, 0], [], []>} : vector<64x16xf32>, vector<128x16xf32>, vector<64x128xf32> -> vector<64x128xf32>
    %c0_3 = arith.constant 0 : index
    %c0_4 = arith.constant 0 : index
    %3 = vector.load %arg8[%c0_3, %c0_4] : memref<64x16xf32, #tpu.memory_space<vmem>>, vector<64x16xf32>
    %c0_5 = arith.constant 0 : index
    %c0_6 = arith.constant 0 : index
    %4 = vector.load %arg2[%c0_5, %c0_6] : memref<128x16xf32, #tpu.memory_space<vmem>>, vector<128x16xf32>
    %cst_7 = arith.constant dense<0.000000e+00> : vector<64x128xf32>
    %5 = tpu.matmul %3, %4, %cst_7 {dimension_numbers = #tpu.dot_dimension_numbers<[1], [1], [0], [0], [0, 0, 1, 0], [], []>} : vector<64x16xf32>, vector<128x16xf32>, vector<64x128xf32> -> vector<64x128xf32>
    %6 = arith.addf %2, %5 : vector<64x128xf32>
    %c0_8 = arith.constant 0 : index
    %c0_9 = arith.constant 0 : index
    %7 = vector.load %arg9[%c0_8, %c0_9] : memref<64x16xf32, #tpu.memory_space<vmem>>, vector<64x16xf32>
    %c0_10 = arith.constant 0 : index
    %c0_11 = arith.constant 0 : index
    %8 = vector.load %arg3[%c0_10, %c0_11] : memref<128x16xf32, #tpu.memory_space<vmem>>, vector<128x16xf32>
    %cst_12 = arith.constant dense<0.000000e+00> : vector<64x128xf32>
    %9 = tpu.matmul %7, %8, %cst_12 {dimension_numbers = #tpu.dot_dimension_numbers<[1], [1], [0], [0], [0, 0, 1, 0], [], []>} : vector<64x16xf32>, vector<128x16xf32>, vector<64x128xf32> -> vector<64x128xf32>
    %10 = arith.addf %6, %9 : vector<64x128xf32>
    %c0_13 = arith.constant 0 : index
    %c0_14 = arith.constant 0 : index
    %11 = vector.load %arg10[%c0_13, %c0_14] : memref<64x8xf32, #tpu.memory_space<vmem>>, vector<64x8xf32>
    %c0_15 = arith.constant 0 : index
    %c0_16 = arith.constant 0 : index
    %12 = vector.load %arg4[%c0_15, %c0_16] : memref<128x8xf32, #tpu.memory_space<vmem>>, vector<128x8xf32>
    %cst_17 = arith.constant dense<0.000000e+00> : vector<64x128xf32>
    %13 = tpu.matmul %11, %12, %cst_17 {dimension_numbers = #tpu.dot_dimension_numbers<[1], [1], [0], [0], [0, 0, 1, 0], [], []>} : vector<64x8xf32>, vector<128x8xf32>, vector<64x128xf32> -> vector<64x128xf32>
    %14 = arith.addf %10, %13 : vector<64x128xf32>
    %c0_18 = arith.constant 0 : index
    %c0_19 = arith.constant 0 : index
    %15 = vector.load %arg11[%c0_18, %c0_19] : memref<64x8xf32, #tpu.memory_space<vmem>>, vector<64x8xf32>
    %c0_20 = arith.constant 0 : index
    %c0_21 = arith.constant 0 : index
    %16 = vector.load %arg5[%c0_20, %c0_21] : memref<128x8xf32, #tpu.memory_space<vmem>>, vector<128x8xf32>
    %cst_22 = arith.constant dense<0.000000e+00> : vector<64x128xf32>
    %17 = tpu.matmul %15, %16, %cst_22 {dimension_numbers = #tpu.dot_dimension_numbers<[1], [1], [0], [0], [0, 0, 1, 0], [], []>} : vector<64x8xf32>, vector<128x8xf32>, vector<64x128xf32> -> vector<64x128xf32>
    %18 = arith.addf %14, %17 : vector<64x128xf32>
    %c0_23 = arith.constant 0 : index
    %c0_24 = arith.constant 0 : index
    %19 = vector.load %arg12[%c0_23, %c0_24] : memref<64x8xf32, #tpu.memory_space<vmem>>, vector<64x8xf32>
    %c0_25 = arith.constant 0 : index
    %c0_26 = arith.constant 0 : index
    %20 = vector.load %arg6[%c0_25, %c0_26] : memref<128x8xf32, #tpu.memory_space<vmem>>, vector<128x8xf32>
    %cst_27 = arith.constant dense<0.000000e+00> : vector<64x128xf32>
    %21 = tpu.matmul %19, %20, %cst_27 {dimension_numbers = #tpu.dot_dimension_numbers<[1], [1], [0], [0], [0, 0, 1, 0], [], []>} : vector<64x8xf32>, vector<128x8xf32>, vector<64x128xf32> -> vector<64x128xf32>
    %22 = arith.addf %18, %21 : vector<64x128xf32>
    %c0_28 = arith.constant 0 : index
    %c0_29 = arith.constant 0 : index
    %23 = vector.load %arg13[%c0_28, %c0_29] : memref<64x1xf32, #tpu.memory_space<vmem>>, vector<64x1xf32>
    %24 = vector.broadcast %23 : vector<64x1xf32> to vector<64x128xf32>
    %25 = arith.addf %22, %24 : vector<64x128xf32>
    %cst_30 = arith.constant 0.000000e+00 : f32
    %26 = vector.broadcast %cst_30 : f32 to vector<64x128xf32>
    %27 = arith.maximumf %25, %26 : vector<64x128xf32>
    %c0_31 = arith.constant 0 : index
    %c0_32 = arith.constant 0 : index
    %28 = vector.load %arg14[%c0_31, %c0_32] : memref<64x64xf32, #tpu.memory_space<vmem>>, vector<64x64xf32>
    %cst_33 = arith.constant dense<0.000000e+00> : vector<64x128xf32>
    %29 = tpu.matmul %28, %27, %cst_33 {dimension_numbers = #tpu.dot_dimension_numbers<[1], [0], [0], [1], [0, 0, 1, 1], [], []>} : vector<64x64xf32>, vector<64x128xf32>, vector<64x128xf32> -> vector<64x128xf32>
    %c0_34 = arith.constant 0 : index
    %c0_35 = arith.constant 0 : index
    %30 = vector.load %arg15[%c0_34, %c0_35] : memref<64x1xf32, #tpu.memory_space<vmem>>, vector<64x1xf32>
    %31 = vector.broadcast %30 : vector<64x1xf32> to vector<64x128xf32>
    %32 = arith.addf %29, %31 : vector<64x128xf32>
    %cst_36 = arith.constant 0.000000e+00 : f32
    %33 = vector.broadcast %cst_36 : f32 to vector<64x128xf32>
    %34 = arith.maximumf %32, %33 : vector<64x128xf32>
    %c0_37 = arith.constant 0 : index
    %c0_38 = arith.constant 0 : index
    %35 = vector.load %arg16[%c0_37, %c0_38] : memref<32x64xf32, #tpu.memory_space<vmem>>, vector<32x64xf32>
    %cst_39 = arith.constant dense<0.000000e+00> : vector<32x128xf32>
    %36 = tpu.matmul %35, %34, %cst_39 {dimension_numbers = #tpu.dot_dimension_numbers<[1], [0], [0], [1], [0, 0, 1, 1], [], []>} : vector<32x64xf32>, vector<64x128xf32>, vector<32x128xf32> -> vector<32x128xf32>
    %c0_40 = arith.constant 0 : index
    %c0_41 = arith.constant 0 : index
    %37 = vector.load %arg17[%c0_40, %c0_41] : memref<32x1xf32, #tpu.memory_space<vmem>>, vector<32x1xf32>
    %38 = vector.broadcast %37 : vector<32x1xf32> to vector<32x128xf32>
    %39 = arith.addf %36, %38 : vector<32x128xf32>
    %cst_42 = arith.constant 0.000000e+00 : f32
    %40 = vector.broadcast %cst_42 : f32 to vector<32x128xf32>
    %41 = arith.maximumf %39, %40 : vector<32x128xf32>
    %c0_43 = arith.constant 0 : index
    %c0_44 = arith.constant 0 : index
    %42 = vector.load %arg18[%c0_43, %c0_44] : memref<32x1xf32, #tpu.memory_space<vmem>>, vector<32x1xf32>
    %43 = vector.broadcast %42 : vector<32x1xf32> to vector<32x128xf32>
    %44 = arith.mulf %43, %41 : vector<32x128xf32>
    %cst_45 = arith.constant dense<0.000000e+00> : vector<128xf32>
    %45 = vector.multi_reduction <add>, %44, %cst_45 [0] : vector<32x128xf32> to vector<128xf32>
    %46 = vector.shape_cast %45 : vector<128xf32> to vector<1x128xf32>
    %c0_46 = arith.constant 0 : index
    %c0_47 = arith.constant 0 : index
    %47 = vector.load %arg19[%c0_46, %c0_47] : memref<1x1xf32, #tpu.memory_space<vmem>>, vector<1x1xf32>
    %48 = vector.broadcast %47 : vector<1x1xf32> to vector<1x128xf32>
    %49 = arith.addf %46, %48 : vector<1x128xf32>
    %c0_48 = arith.constant 0 : index
    %c0_49 = arith.constant 0 : index
    %50 = vector.load %arg20[%c0_48, %c0_49] : memref<1x128xf32, #tpu.memory_space<vmem>>, vector<1x128xf32>
    tpu.vector_store %arg20[%c0_48, %c0_49], %49 {strides = array<i32>} : memref<1x128xf32, #tpu.memory_space<vmem>>, vector<1x128xf32>,
    return
  }
  func.func @transform_0(%arg0: i32) -> (i32, i32) {
    %c0_i32 = arith.constant 0 : i32
    %c0_i32_0 = arith.constant 0 : i32
    return %arg0, %c0_i32 : i32, i32
  }
  func.func @transform_1(%arg0: i32) -> (i32, i32) {
    %c0_i32 = arith.constant 0 : i32
    %c0_i32_0 = arith.constant 0 : i32
    return %arg0, %c0_i32 : i32, i32
  }
  func.func @transform_2(%arg0: i32) -> (i32, i32) {
    %c0_i32 = arith.constant 0 : i32
    %c0_i32_0 = arith.constant 0 : i32
    return %arg0, %c0_i32 : i32, i32
  }
  func.func @transform_3(%arg0: i32) -> (i32, i32) {
    %c0_i32 = arith.constant 0 : i32
    %c0_i32_0 = arith.constant 0 : i32
    return %arg0, %c0_i32 : i32, i32
  }
  func.func @transform_4(%arg0: i32) -> (i32, i32) {
    %c0_i32 = arith.constant 0 : i32
    %c0_i32_0 = arith.constant 0 : i32
    return %arg0, %c0_i32 : i32, i32
  }
  func.func @transform_5(%arg0: i32) -> (i32, i32) {
    %c0_i32 = arith.constant 0 : i32
    %c0_i32_0 = arith.constant 0 : i32
    return %arg0, %c0_i32 : i32, i32
  }
  func.func @transform_6(%arg0: i32) -> (i32, i32) {
    %c0_i32 = arith.constant 0 : i32
    %c0_i32_0 = arith.constant 0 : i32
    %c0_i32_1 = arith.constant 0 : i32
    return %c0_i32, %c0_i32_0 : i32, i32
  }
  func.func @transform_7(%arg0: i32) -> (i32, i32) {
    %c0_i32 = arith.constant 0 : i32
    %c0_i32_0 = arith.constant 0 : i32
    %c0_i32_1 = arith.constant 0 : i32
    return %c0_i32, %c0_i32_0 : i32, i32
  }
  func.func @transform_8(%arg0: i32) -> (i32, i32) {
    %c0_i32 = arith.constant 0 : i32
    %c0_i32_0 = arith.constant 0 : i32
    %c0_i32_1 = arith.constant 0 : i32
    return %c0_i32, %c0_i32_0 : i32, i32
  }
  func.func @transform_9(%arg0: i32) -> (i32, i32) {
    %c0_i32 = arith.constant 0 : i32
    %c0_i32_0 = arith.constant 0 : i32
    %c0_i32_1 = arith.constant 0 : i32
    return %c0_i32, %c0_i32_0 : i32, i32
  }
  func.func @transform_10(%arg0: i32) -> (i32, i32) {
    %c0_i32 = arith.constant 0 : i32
    %c0_i32_0 = arith.constant 0 : i32
    %c0_i32_1 = arith.constant 0 : i32
    return %c0_i32, %c0_i32_0 : i32, i32
  }
  func.func @transform_11(%arg0: i32) -> (i32, i32) {
    %c0_i32 = arith.constant 0 : i32
    %c0_i32_0 = arith.constant 0 : i32
    %c0_i32_1 = arith.constant 0 : i32
    return %c0_i32, %c0_i32_0 : i32, i32
  }
  func.func @transform_12(%arg0: i32) -> (i32, i32) {
    %c0_i32 = arith.constant 0 : i32
    %c0_i32_0 = arith.constant 0 : i32
    %c0_i32_1 = arith.constant 0 : i32
    return %c0_i32, %c0_i32_0 : i32, i32
  }
  func.func @transform_13(%arg0: i32) -> (i32, i32) {
    %c0_i32 = arith.constant 0 : i32
    %c0_i32_0 = arith.constant 0 : i32
    %c0_i32_1 = arith.constant 0 : i32
    return %c0_i32, %c0_i32_0 : i32, i32
  }
  func.func @transform_14(%arg0: i32) -> (i32, i32) {
    %c0_i32 = arith.constant 0 : i32
    %c0_i32_0 = arith.constant 0 : i32
    %c0_i32_1 = arith.constant 0 : i32
    return %c0_i32, %c0_i32_0 : i32, i32
  }
  func.func @transform_15(%arg0: i32) -> (i32, i32) {
    %c0_i32 = arith.constant 0 : i32
    %c0_i32_0 = arith.constant 0 : i32
    %c0_i32_1 = arith.constant 0 : i32
    return %c0_i32, %c0_i32_0 : i32, i32
  }
  func.func @transform_16(%arg0: i32) -> (i32, i32) {
    %c0_i32 = arith.constant 0 : i32
    %c0_i32_0 = arith.constant 0 : i32
    %c0_i32_1 = arith.constant 0 : i32
    return %c0_i32, %c0_i32_0 : i32, i32
  }
  func.func @transform_17(%arg0: i32) -> (i32, i32) {
    %c0_i32 = arith.constant 0 : i32
    %c0_i32_0 = arith.constant 0 : i32
    %c0_i32_1 = arith.constant 0 : i32
    return %c0_i32, %c0_i32_0 : i32, i32
  }
  func.func @transform_18(%arg0: i32) -> (i32, i32) {
    %c0_i32 = arith.constant 0 : i32
    %c0_i32_0 = arith.constant 0 : i32
    %c0_i32_1 = arith.constant 0 : i32
    return %c0_i32, %c0_i32_0 : i32, i32
  }
  func.func @transform_19(%arg0: i32) -> (i32, i32) {
    %c0_i32 = arith.constant 0 : i32
    %c0_i32_0 = arith.constant 0 : i32
    return %c0_i32, %arg0 : i32, i32
  }
}

</mosaic_0001>

<llo_original>
// kernel: tpu_custom_call.1
$region0: #{tpu_custom_call.1}
  #allocation0 [shape = 'u32[]', space=smem, size = 0x4, offset = 0x4, fixed_abs, tag = 'smem constant byte address 0x4 - core index']
  #allocation1 [shape = 'u32[144,128]{1,0:T(1,128)}', space=vmem, size = 0x12000, scoped, tag = 'internal scratch']
  #allocation2 [shape = 'f32[1,1]{1,0:T(1,128)S(1)}', space=vmem, size = 0x200, scoped, tag = 'scoped memory for tpu_custom_call.1']
  %s0 = inlined_call_operand.vmem [shape: f32[128,16], index: 0, kind: input, shape index: {}]
  %s1 = inlined_call_operand.vmem [shape: f32[128,16], index: 1, kind: input, shape index: {}]
  %s2 = inlined_call_operand.vmem [shape: f32[128,16], index: 2, kind: input, shape index: {}]
  %s3 = inlined_call_operand.vmem [shape: f32[128,8], index: 3, kind: input, shape index: {}]
  %s4 = inlined_call_operand.vmem [shape: f32[128,8], index: 4, kind: input, shape index: {}]
  %s5 = inlined_call_operand.vmem [shape: f32[128,8], index: 5, kind: input, shape index: {}]
  %s6 = inlined_call_operand.vmem [shape: f32[64,16], index: 6, kind: input, shape index: {}]
  %s7 = inlined_call_operand.vmem [shape: f32[64,16], index: 7, kind: input, shape index: {}]
  %s8 = inlined_call_operand.vmem [shape: f32[64,16], index: 8, kind: input, shape index: {}]
  %s9 = inlined_call_operand.vmem [shape: f32[64,8], index: 9, kind: input, shape index: {}]
  %s10 = inlined_call_operand.vmem [shape: f32[64,8], index: 10, kind: input, shape index: {}]
  %s11 = inlined_call_operand.vmem [shape: f32[64,8], index: 11, kind: input, shape index: {}]
  %s12 = inlined_call_operand.vmem [shape: f32[64,1], index: 12, kind: input, shape index: {}]
  %s13 = inlined_call_operand.vmem [shape: f32[64,64], index: 13, kind: input, shape index: {}]
  %s14 = inlined_call_operand.vmem [shape: f32[64,1], index: 14, kind: input, shape index: {}]
  %s15 = inlined_call_operand.vmem [shape: f32[32,64], index: 15, kind: input, shape index: {}]
  %s16 = inlined_call_operand.vmem [shape: f32[32,1], index: 16, kind: input, shape index: {}]
  %s17 = inlined_call_operand.vmem [shape: f32[32,1], index: 17, kind: input, shape index: {}]
  %s18 = inlined_call_operand.<no memory space> [shape: f32[1,1], index: 18, kind: input, shape index: {}]
  %s19 = inlined_call_operand.hbm [shape: f32[1,128], index: 19, kind: output, shape index: {}]
  %s20 = sld [smem:[#allocation0]]
  $region86: #{tpu_custom_call.1} parent=0
    _
  %s22 = ssub.s32 1, %s20
  %s23 = scalar_select 0, %s22, %s20
  %v24 = vstv %s18
  %25 = vst [vmem:[#allocation2] sm:$0x1] %v24
  $region1: #{tpu_custom_call.1} parent=0
    #allocation3 [shape = 'u8[512]{0}', space=vmem, size = 0x400, scoped, tag = 'output window, operand 0, single buffered']
    #allocation4 [shape = 's32[1]{0}', space=sflag, size = 0x4, scoped, tag = 'scoped memory for tpu_custom_call.1']
    %26 = vsyncpa [#allocation4], 0
    // Predicated region
    $region2: #{tpu_custom_call.1} parent=1 // pred_check
      _
    $region3: #{tpu_custom_call.1} parent=1 // pred_check_branch
      %28 = sbr.rel (0) target = $region5
    $region4: #{tpu_custom_call.1} parent=1 // pred_region
      _
    $region5: #{tpu_custom_call.1} parent=1 // pred_fallthru
      _
    // Predicated region
    $region6: #{tpu_custom_call.1} parent=1 // pred_check
      _
    $region7: #{tpu_custom_call.1} parent=1 // pred_check_branch
      %30 = sbr.rel (0) target = $region9
    $region8: #{tpu_custom_call.1} parent=1 // pred_region
      _
    $region9: #{tpu_custom_call.1} parent=1 // pred_fallthru
      _
    // Predicated region
    $region10: #{tpu_custom_call.1} parent=1 // pred_check
      _
    $region11: #{tpu_custom_call.1} parent=1 // pred_check_branch
      %32 = sbr.rel (0) target = $region13
    $region12: #{tpu_custom_call.1} parent=1 // pred_region
      _
    $region13: #{tpu_custom_call.1} parent=1 // pred_fallthru
      _
    // Predicated region
    $region14: #{tpu_custom_call.1} parent=1 // pred_check
      _
    $region15: #{tpu_custom_call.1} parent=1 // pred_check_branch
      %34 = sbr.rel (0) target = $region17
    $region16: #{tpu_custom_call.1} parent=1 // pred_region
      _
    $region17: #{tpu_custom_call.1} parent=1 // pred_fallthru
      _
    // Predicated region
    $region18: #{tpu_custom_call.1} parent=1 // pred_check
      _
    $region19: #{tpu_custom_call.1} parent=1 // pred_check_branch
      %36 = sbr.rel (0) target = $region21
    $region20: #{tpu_custom_call.1} parent=1 // pred_region
      _
    $region21: #{tpu_custom_call.1} parent=1 // pred_fallthru
      _
    // Predicated region
    $region22: #{tpu_custom_call.1} parent=1 // pred_check
      _
    $region23: #{tpu_custom_call.1} parent=1 // pred_check_branch
      %38 = sbr.rel (0) target = $region25
    $region24: #{tpu_custom_call.1} parent=1 // pred_region
      _
    $region25: #{tpu_custom_call.1} parent=1 // pred_fallthru
      _
    // Predicated region
    $region26: #{tpu_custom_call.1} parent=1 // pred_check
      _
    $region27: #{tpu_custom_call.1} parent=1 // pred_check_branch
      %40 = sbr.rel (0) target = $region29
    $region28: #{tpu_custom_call.1} parent=1 // pred_region
      _
    $region29: #{tpu_custom_call.1} parent=1 // pred_fallthru
      _
    // Predicated region
    $region30: #{tpu_custom_call.1} parent=1 // pred_check
      _
    $region31: #{tpu_custom_call.1} parent=1 // pred_check_branch
      %42 = sbr.rel (0) target = $region33
    $region32: #{tpu_custom_call.1} parent=1 // pred_region
      _
    $region33: #{tpu_custom_call.1} parent=1 // pred_fallthru
      _
    // Predicated region
    $region34: #{tpu_custom_call.1} parent=1 // pred_check
      _
    $region35: #{tpu_custom_call.1} parent=1 // pred_check_branch
      %44 = sbr.rel (0) target = $region37
    $region36: #{tpu_custom_call.1} parent=1 // pred_region
      _
    $region37: #{tpu_custom_call.1} parent=1 // pred_fallthru
      _
    // Predicated region
    $region38: #{tpu_custom_call.1} parent=1 // pred_check
      _
    $region39: #{tpu_custom_call.1} parent=1 // pred_check_branch
      %46 = sbr.rel (0) target = $region41
    $region40: #{tpu_custom_call.1} parent=1 // pred_region
      _
    $region41: #{tpu_custom_call.1} parent=1 // pred_fallthru
      _
    // Predicated region
    $region42: #{tpu_custom_call.1} parent=1 // pred_check
      _
    $region43: #{tpu_custom_call.1} parent=1 // pred_check_branch
      %48 = sbr.rel (0) target = $region45
    $region44: #{tpu_custom_call.1} parent=1 // pred_region
      _
    $region45: #{tpu_custom_call.1} parent=1 // pred_fallthru
      _
    // Predicated region
    $region46: #{tpu_custom_call.1} parent=1 // pred_check
      _
    $region47: #{tpu_custom_call.1} parent=1 // pred_check_branch
      %50 = sbr.rel (0) target = $region49
    $region48: #{tpu_custom_call.1} parent=1 // pred_region
      _
    $region49: #{tpu_custom_call.1} parent=1 // pred_fallthru
      _
    // Predicated region
    $region50: #{tpu_custom_call.1} parent=1 // pred_check
      _
    $region51: #{tpu_custom_call.1} parent=1 // pred_check_branch
      %52 = sbr.rel (0) target = $region53
    $region52: #{tpu_custom_call.1} parent=1 // pred_region
      _
    $region53: #{tpu_custom_call.1} parent=1 // pred_fallthru
      _
    // Predicated region
    $region54: #{tpu_custom_call.1} parent=1 // pred_check
      _
    $region55: #{tpu_custom_call.1} parent=1 // pred_check_branch
      %54 = sbr.rel (0) target = $region57
    $region56: #{tpu_custom_call.1} parent=1 // pred_region
      _
    $region57: #{tpu_custom_call.1} parent=1 // pred_fallthru
      _
    // Predicated region
    $region58: #{tpu_custom_call.1} parent=1 // pred_check
      _
    $region59: #{tpu_custom_call.1} parent=1 // pred_check_branch
      %56 = sbr.rel (0) target = $region61
    $region60: #{tpu_custom_call.1} parent=1 // pred_region
      _
    $region61: #{tpu_custom_call.1} parent=1 // pred_fallthru
      _
    // Predicated region
    $region62: #{tpu_custom_call.1} parent=1 // pred_check
      _
    $region63: #{tpu_custom_call.1} parent=1 // pred_check_branch
      %58 = sbr.rel (0) target = $region65
    $region64: #{tpu_custom_call.1} parent=1 // pred_region
      _
    $region65: #{tpu_custom_call.1} parent=1 // pred_fallthru
      _
    // Predicated region
    $region66: #{tpu_custom_call.1} parent=1 // pred_check
      _
    $region67: #{tpu_custom_call.1} parent=1 // pred_check_branch
      %60 = sbr.rel (0) target = $region69
    $region68: #{tpu_custom_call.1} parent=1 // pred_region
      _
    $region69: #{tpu_custom_call.1} parent=1 // pred_fallthru
      _
    // Predicated region
    $region70: #{tpu_custom_call.1} parent=1 // pred_check
      _
    $region71: #{tpu_custom_call.1} parent=1 // pred_check_branch
      %62 = sbr.rel (0) target = $region73
    $region72: #{tpu_custom_call.1} parent=1 // pred_region
      _
    $region73: #{tpu_custom_call.1} parent=1 // pred_fallthru
      _
    // Predicated region
    $region74: #{tpu_custom_call.1} parent=1 // pred_check
      _
    $region75: #{tpu_custom_call.1} parent=1 // pred_check_branch
      %64 = sbr.rel (0) target = $region77
    $region76: #{tpu_custom_call.1} parent=1 // pred_region
      _
    $region77: #{tpu_custom_call.1} parent=1 // pred_fallthru
      _
    %v65 = vld [vmem:[%s6] sm:$0xff]
    %v66 = vld [vmem:[%s6 + $0x8] sm:$0xff]
    %v67 = vld [vmem:[%s6 + $0x10] sm:$0xff]
    %v68 = vld [vmem:[%s6 + $0x18] sm:$0xff]
    %v69 = vld [vmem:[%s6 + $0x20] sm:$0xff]
    %v70 = vld [vmem:[%s6 + $0x28] sm:$0xff]
    %v71 = vld [vmem:[%s6 + $0x30] sm:$0xff]
    %v72 = vld [vmem:[%s6 + $0x38] sm:$0xff]
    %v73 = vld [vmem:[%s0] sm:$0xff]
    %v74 = vld [vmem:[%s0 + $0x8] sm:$0xff]
    %v75 = vld [vmem:[%s0 + $0x10] sm:$0xff]
    %v76 = vld [vmem:[%s0 + $0x18] sm:$0xff]
    %v77 = vld [vmem:[%s0 + $0x20] sm:$0xff]
    %v78 = vld [vmem:[%s0 + $0x28] sm:$0xff]
    %v79 = vld [vmem:[%s0 + $0x30] sm:$0xff]
    %v80 = vld [vmem:[%s0 + $0x38] sm:$0xff]
    %v81 = vld [vmem:[%s0 + $0x40] sm:$0xff]
    %v82 = vld [vmem:[%s0 + $0x48] sm:$0xff]
    %v83 = vld [vmem:[%s0 + $0x50] sm:$0xff]
    %v84 = vld [vmem:[%s0 + $0x58] sm:$0xff]
    %v85 = vld [vmem:[%s0 + $0x60] sm:$0xff]
    %v86 = vld [vmem:[%s0 + $0x68] sm:$0xff]
    %v87 = vld [vmem:[%s0 + $0x70] sm:$0xff]
    %v88 = vld [vmem:[%s0 + $0x78] sm:$0xff]
    %v89 = vld [vmem:[%s7] sm:$0xff]
    %v90 = vld [vmem:[%s7 + $0x8] sm:$0xff]
    %v91 = vld [vmem:[%s7 + $0x10] sm:$0xff]
    %v92 = vld [vmem:[%s7 + $0x18] sm:$0xff]
    %v93 = vld [vmem:[%s7 + $0x20] sm:$0xff]
    %v94 = vld [vmem:[%s7 + $0x28] sm:$0xff]
    %v95 = vld [vmem:[%s7 + $0x30] sm:$0xff]
    %v96 = vld [vmem:[%s7 + $0x38] sm:$0xff]
    %v97 = vld [vmem:[%s1] sm:$0xff]
    %v98 = vld [vmem:[%s1 + $0x8] sm:$0xff]
    %v99 = vld [vmem:[%s1 + $0x10] sm:$0xff]
    %v100 = vld [vmem:[%s1 + $0x18] sm:$0xff]
    %v101 = vld [vmem:[%s1 + $0x20] sm:$0xff]
    %v102 = vld [vmem:[%s1 + $0x28] sm:$0xff]
    %v103 = vld [vmem:[%s1 + $0x30] sm:$0xff]
    %v104 = vld [vmem:[%s1 + $0x38] sm:$0xff]
    %v105 = vld [vmem:[%s1 + $0x40] sm:$0xff]
    %v106 = vld [vmem:[%s1 + $0x48] sm:$0xff]
    %v107 = vld [vmem:[%s1 + $0x50] sm:$0xff]
    %v108 = vld [vmem:[%s1 + $0x58] sm:$0xff]
    %v109 = vld [vmem:[%s1 + $0x60] sm:$0xff]
    %v110 = vld [vmem:[%s1 + $0x68] sm:$0xff]
    %v111 = vld [vmem:[%s1 + $0x70] sm:$0xff]
    %v112 = vld [vmem:[%s1 + $0x78] sm:$0xff]
    %vm113 = vcmask 130048
    %v115 = vsel %vm113, %v89, 0
    %v118 = vsel %vm113, %v90, 0
    %v121 = vsel %vm113, %v91, 0
    %v124 = vsel %vm113, %v92, 0
    %v127 = vsel %vm113, %v93, 0
    %v130 = vsel %vm113, %v94, 0
    %v133 = vsel %vm113, %v95, 0
    %v136 = vsel %vm113, %v96, 0
    %v139 = vsel %vm113, %v97, 0
    %v142 = vsel %vm113, %v98, 0
    %v145 = vsel %vm113, %v99, 0
    %v148 = vsel %vm113, %v100, 0
    %v151 = vsel %vm113, %v101, 0
    %v154 = vsel %vm113, %v102, 0
    %v157 = vsel %vm113, %v103, 0
    %v160 = vsel %vm113, %v104, 0
    %v163 = vsel %vm113, %v105, 0
    %v166 = vsel %vm113, %v106, 0
    %v169 = vsel %vm113, %v107, 0
    %v172 = vsel %vm113, %v108, 0
    %v175 = vsel %vm113, %v109, 0
    %v178 = vsel %vm113, %v110, 0
    %v181 = vsel %vm113, %v111, 0
    %v184 = vsel %vm113, %v112, 0
    %186 = vmatprep.subr.mxu0 0.0
    %187 = vmatpush1.xpose.msra.mxu0 %v184
    %188 = vmatprep.subr.mxu0 0.0
    %189 = vmatpush1.xpose.msra.mxu0 %v181
    %190 = vmatprep.subr.mxu0 0.0
    %191 = vmatpush1.xpose.msra.mxu0 %v178
    %192 = vmatprep.subr.mxu0 0.0
    %193 = vmatpush1.xpose.msra.mxu0 %v175
    %194 = vmatprep.subr.mxu0 0.0
    %195 = vmatpush1.xpose.msra.mxu0 %v172
    %196 = vmatprep.subr.mxu0 0.0
    %197 = vmatpush1.xpose.msra.mxu0 %v169
    %198 = vmatprep.subr.mxu0 0.0
    %199 = vmatpush1.xpose.msra.mxu0 %v166
    %200 = vmatprep.subr.mxu0 0.0
    %201 = vmatpush1.xpose.msra.mxu0 %v163
    %202 = vmatprep.subr.mxu0 0.0
    %203 = vmatpush1.xpose.msra.mxu0 %v160
    %204 = vmatprep.subr.mxu0 0.0
    %205 = vmatpush1.xpose.msra.mxu0 %v157
    %206 = vmatprep.subr.mxu0 0.0
    %207 = vmatpush1.xpose.msra.mxu0 %v154
    %208 = vmatprep.subr.mxu0 0.0
    %209 = vmatpush1.xpose.msra.mxu0 %v151
    %210 = vmatprep.subr.mxu0 0.0
    %211 = vmatpush1.xpose.msra.mxu0 %v148
    %212 = vmatprep.subr.mxu0 0.0
    %213 = vmatpush1.xpose.msra.mxu0 %v145
    %214 = vmatprep.subr.mxu0 0.0
    %215 = vmatpush1.xpose.msra.mxu0 %v142
    %216 = vmatprep.subr.mxu0 0.0
    %217 = vmatpush1.xpose.msra.mxu0 %v139
    %218 = vmatprep.subr.mxu0 0.0
    %219 = vmatpush2.xpose.msra.mxu0 0.0
    %220 = vmatprep.subr.mxu0 0.0
    %221 = vmatpush2.xpose.msra.mxu0 0.0
    %222 = vmatprep.subr.mxu0 0.0
    %223 = vmatpush2.xpose.msra.mxu0 0.0
    %224 = vmatprep.subr.mxu0 0.0
    %225 = vmatpush2.xpose.msra.mxu0 0.0
    %226 = vmatprep.subr.mxu0 0.0
    %227 = vmatpush2.xpose.msra.mxu0 0.0
    %228 = vmatprep.subr.mxu0 0.0
    %229 = vmatpush2.xpose.msra.mxu0 0.0
    %230 = vmatprep.subr.mxu0 0.0
    %231 = vmatpush2.xpose.msra.mxu0 0.0
    %232 = vmatprep.subr.mxu0 0.0
    %233 = vmatpush2.xpose.msra.mxu0 0.0
    %234 = vmatprep.subr.mxu0 0.0
    %235 = vmatpush2.xpose.msra.mxu0 0.0
    %236 = vmatprep.subr.mxu0 0.0
    %237 = vmatpush2.xpose.msra.mxu0 0.0
    %238 = vmatprep.subr.mxu0 0.0
    %239 = vmatpush2.xpose.msra.mxu0 0.0
    %240 = vmatprep.subr.mxu0 0.0
    %241 = vmatpush2.xpose.msra.mxu0 0.0
    %242 = vmatprep.subr.mxu0 0.0
    %243 = vmatpush2.xpose.msra.mxu0 0.0
    %244 = vmatprep.subr.mxu0 0.0
    %245 = vmatpush2.xpose.msra.mxu0 0.0
    %246 = vmatprep.subr.mxu0 0.0
    %247 = vmatpush2.xpose.msra.mxu0 0.0
    %248 = vmatprep.subr.mxu0 0.0
    %249 = vmatpush2.xpose.msra.mxu0 0.0
    %250 = vmatprep.mubr.f32.mxu0 0.0
    %251 = vmatmul.mubr.f32.gmra.mxu0 %v115
    %v252 = vpop.f32.mrf.mxu0
    %v253 = vadd.f32 0.0, %v252
    %v254 = vpop.f32.mrf.mxu0
    %255 = vmatprep.mubr.f32.mxu0 0.0
    %256 = vmatmul.mubr.f32.gmra.mxu0 %v118
    %v257 = vpop.f32.mrf.mxu0
    %v258 = vadd.f32 0.0, %v257
    %v259 = vpop.f32.mrf.mxu0
    %260 = vmatprep.mubr.f32.mxu0 0.0
    %261 = vmatmul.mubr.f32.gmra.mxu0 %v121
    %v262 = vpop.f32.mrf.mxu0
    %v263 = vadd.f32 0.0, %v262
    %v264 = vpop.f32.mrf.mxu0
    %265 = vmatprep.mubr.f32.mxu0 0.0
    %266 = vmatmul.mubr.f32.gmra.mxu0 %v124
    %v267 = vpop.f32.mrf.mxu0
    %v268 = vadd.f32 0.0, %v267
    %v269 = vpop.f32.mrf.mxu0
    %270 = vmatprep.mubr.f32.mxu0 0.0
    %271 = vmatmul.mubr.f32.gmra.mxu0 %v127
    %v272 = vpop.f32.mrf.mxu0
    %v273 = vadd.f32 0.0, %v272
    %v274 = vpop.f32.mrf.mxu0
    %275 = vmatprep.mubr.f32.mxu0 0.0
    %276 = vmatmul.mubr.f32.gmra.mxu0 %v130
    %v277 = vpop.f32.mrf.mxu0
    %v278 = vadd.f32 0.0, %v277
    %v279 = vpop.f32.mrf.mxu0
    %280 = vmatprep.mubr.f32.mxu0 0.0
    %281 = vmatmul.mubr.f32.gmra.mxu0 %v133
    %v282 = vpop.f32.mrf.mxu0
    %v283 = vadd.f32 0.0, %v282
    %v284 = vpop.f32.mrf.mxu0
    %285 = vmatprep.mubr.f32.mxu0 0.0
    %286 = vmatmul.mubr.f32.gmra.mxu0 %v136
    %v287 = vpop.f32.mrf.mxu0
    %v288 = vadd.f32 0.0, %v287
    %v289 = vpop.f32.mrf.mxu0
    %290 = vdwg.mxu0
    %v292 = vsel %vm113, %v65, 0
    %v295 = vsel %vm113, %v66, 0
    %v298 = vsel %vm113, %v67, 0
    %v301 = vsel %vm113, %v68, 0
    %v304 = vsel %vm113, %v69, 0
    %v307 = vsel %vm113, %v70, 0
    %v310 = vsel %vm113, %v71, 0
    %v313 = vsel %vm113, %v72, 0
    %v316 = vsel %vm113, %v73, 0
    %v319 = vsel %vm113, %v74, 0
    %v322 = vsel %vm113, %v75, 0
    %v325 = vsel %vm113, %v76, 0
    %v328 = vsel %vm113, %v77, 0
    %v331 = vsel %vm113, %v78, 0
    %v334 = vsel %vm113, %v79, 0
    %v337 = vsel %vm113, %v80, 0
    %v340 = vsel %vm113, %v81, 0
    %v343 = vsel %vm113, %v82, 0
    %v346 = vsel %vm113, %v83, 0
    %v349 = vsel %vm113, %v84, 0
    %v352 = vsel %vm113, %v85, 0
    %v355 = vsel %vm113, %v86, 0
    %v358 = vsel %vm113, %v87, 0
    %v361 = vsel %vm113, %v88, 0
    %363 = vmatprep.subr.mxu0 0.0
    %364 = vmatpush1.xpose.msra.mxu0 %v361
    %365 = vmatprep.subr.mxu0 0.0
    %366 = vmatpush1.xpose.msra.mxu0 %v358
    %367 = vmatprep.subr.mxu0 0.0
    %368 = vmatpush1.xpose.msra.mxu0 %v355
    %369 = vmatprep.subr.mxu0 0.0
    %370 = vmatpush1.xpose.msra.mxu0 %v352
    %371 = vmatprep.subr.mxu0 0.0
    %372 = vmatpush1.xpose.msra.mxu0 %v349
    %373 = vmatprep.subr.mxu0 0.0
    %374 = vmatpush1.xpose.msra.mxu0 %v346
    %375 = vmatprep.subr.mxu0 0.0
    %376 = vmatpush1.xpose.msra.mxu0 %v343
    %377 = vmatprep.subr.mxu0 0.0
    %378 = vmatpush1.xpose.msra.mxu0 %v340
    %379 = vmatprep.subr.mxu0 0.0
    %380 = vmatpush1.xpose.msra.mxu0 %v337
    %381 = vmatprep.subr.mxu0 0.0
    %382 = vmatpush1.xpose.msra.mxu0 %v334
    %383 = vmatprep.subr.mxu0 0.0
    %384 = vmatpush1.xpose.msra.mxu0 %v331
    %385 = vmatprep.subr.mxu0 0.0
    %386 = vmatpush1.xpose.msra.mxu0 %v328
    %387 = vmatprep.subr.mxu0 0.0
    %388 = vmatpush1.xpose.msra.mxu0 %v325
    %389 = vmatprep.subr.mxu0 0.0
    %390 = vmatpush1.xpose.msra.mxu0 %v322
    %391 = vmatprep.subr.mxu0 0.0
    %392 = vmatpush1.xpose.msra.mxu0 %v319
    %393 = vmatprep.subr.mxu0 0.0
    %394 = vmatpush1.xpose.msra.mxu0 %v316
    %395 = vmatprep.subr.mxu0 0.0
    %396 = vmatpush2.xpose.msra.mxu0 0.0
    %397 = vmatprep.subr.mxu0 0.0
    %398 = vmatpush2.xpose.msra.mxu0 0.0
    %399 = vmatprep.subr.mxu0 0.0
    %400 = vmatpush2.xpose.msra.mxu0 0.0
    %401 = vmatprep.subr.mxu0 0.0
    %402 = vmatpush2.xpose.msra.mxu0 0.0
    %403 = vmatprep.subr.mxu0 0.0
    %404 = vmatpush2.xpose.msra.mxu0 0.0
    %405 = vmatprep.subr.mxu0 0.0
    %406 = vmatpush2.xpose.msra.mxu0 0.0
    %407 = vmatprep.subr.mxu0 0.0
    %408 = vmatpush2.xpose.msra.mxu0 0.0
    %409 = vmatprep.subr.mxu0 0.0
    %410 = vmatpush2.xpose.msra.mxu0 0.0
    %411 = vmatprep.subr.mxu0 0.0
    %412 = vmatpush2.xpose.msra.mxu0 0.0
    %413 = vmatprep.subr.mxu0 0.0
    %414 = vmatpush2.xpose.msra.mxu0 0.0
    %415 = vmatprep.subr.mxu0 0.0
    %416 = vmatpush2.xpose.msra.mxu0 0.0
    %417 = vmatprep.subr.mxu0 0.0
    %418 = vmatpush2.xpose.msra.mxu0 0.0
    %419 = vmatprep.subr.mxu0 0.0
    %420 = vmatpush2.xpose.msra.mxu0 0.0
    %421 = vmatprep.subr.mxu0 0.0
    %422 = vmatpush2.xpose.msra.mxu0 0.0
    %423 = vmatprep.subr.mxu0 0.0
    %424 = vmatpush2.xpose.msra.mxu0 0.0
    %425 = vmatprep.subr.mxu0 0.0
    %426 = vmatpush2.xpose.msra.mxu0 0.0
    %427 = vmatprep.mubr.f32.mxu0 0.0
    %428 = vmatmul.mubr.f32.gmra.mxu0 %v292
    %v429 = vpop.f32.mrf.mxu0
    %v430 = vadd.f32 %v253, %v429
    %v431 = vpop.f32.mrf.mxu0
    %432 = vmatprep.mubr.f32.mxu0 0.0
    %433 = vmatmul.mubr.f32.gmra.mxu0 %v295
    %v434 = vpop.f32.mrf.mxu0
    %v435 = vadd.f32 %v258, %v434
    %v436 = vpop.f32.mrf.mxu0
    %437 = vmatprep.mubr.f32.mxu0 0.0
    %438 = vmatmul.mubr.f32.gmra.mxu0 %v298
    %v439 = vpop.f32.mrf.mxu0
    %v440 = vadd.f32 %v263, %v439
    %v441 = vpop.f32.mrf.mxu0
    %442 = vmatprep.mubr.f32.mxu0 0.0
    %443 = vmatmul.mubr.f32.gmra.mxu0 %v301
    %v444 = vpop.f32.mrf.mxu0
    %v445 = vadd.f32 %v268, %v444
    %v446 = vpop.f32.mrf.mxu0
    %447 = vmatprep.mubr.f32.mxu0 0.0
    %448 = vmatmul.mubr.f32.gmra.mxu0 %v304
    %v449 = vpop.f32.mrf.mxu0
    %v450 = vadd.f32 %v273, %v449
    %v451 = vpop.f32.mrf.mxu0
    %452 = vmatprep.mubr.f32.mxu0 0.0
    %453 = vmatmul.mubr.f32.gmra.mxu0 %v307
    %v454 = vpop.f32.mrf.mxu0
    %v455 = vadd.f32 %v278, %v454
    %v456 = vpop.f32.mrf.mxu0
    %457 = vmatprep.mubr.f32.mxu0 0.0
    %458 = vmatmul.mubr.f32.gmra.mxu0 %v310
    %v459 = vpop.f32.mrf.mxu0
    %v460 = vadd.f32 %v283, %v459
    %v461 = vpop.f32.mrf.mxu0
    %462 = vmatprep.mubr.f32.mxu0 0.0
    %463 = vmatmul.mubr.f32.gmra.mxu0 %v313
    %v464 = vpop.f32.mrf.mxu0
    %v465 = vadd.f32 %v288, %v464
    %v466 = vpop.f32.mrf.mxu0
    %467 = vdwg.mxu0
    %v468 = vld [vmem:[%s8] sm:$0xff]
    %v469 = vld [vmem:[%s8 + $0x8] sm:$0xff]
    %v470 = vld [vmem:[%s8 + $0x10] sm:$0xff]
    %v471 = vld [vmem:[%s8 + $0x18] sm:$0xff]
    %v472 = vld [vmem:[%s8 + $0x20] sm:$0xff]
    %v473 = vld [vmem:[%s8 + $0x28] sm:$0xff]
    %v474 = vld [vmem:[%s8 + $0x30] sm:$0xff]
    %v475 = vld [vmem:[%s8 + $0x38] sm:$0xff]
    %v476 = vld [vmem:[%s2] sm:$0xff]
    %v477 = vld [vmem:[%s2 + $0x8] sm:$0xff]
    %v478 = vld [vmem:[%s2 + $0x10] sm:$0xff]
    %v479 = vld [vmem:[%s2 + $0x18] sm:$0xff]
    %v480 = vld [vmem:[%s2 + $0x20] sm:$0xff]
    %v481 = vld [vmem:[%s2 + $0x28] sm:$0xff]
    %v482 = vld [vmem:[%s2 + $0x30] sm:$0xff]
    %v483 = vld [vmem:[%s2 + $0x38] sm:$0xff]
    %v484 = vld [vmem:[%s2 + $0x40] sm:$0xff]
    %v485 = vld [vmem:[%s2 + $0x48] sm:$0xff]
    %v486 = vld [vmem:[%s2 + $0x50] sm:$0xff]
    %v487 = vld [vmem:[%s2 + $0x58] sm:$0xff]
    %v488 = vld [vmem:[%s2 + $0x60] sm:$0xff]
    %v489 = vld [vmem:[%s2 + $0x68] sm:$0xff]
    %v490 = vld [vmem:[%s2 + $0x70] sm:$0xff]
    %v491 = vld [vmem:[%s2 + $0x78] sm:$0xff]
    %v493 = vsel %vm113, %v468, 0
    %v496 = vsel %vm113, %v469, 0
    %v499 = vsel %vm113, %v470, 0
    %v502 = vsel %vm113, %v471, 0
    %v505 = vsel %vm113, %v472, 0
    %v508 = vsel %vm113, %v473, 0
    %v511 = vsel %vm113, %v474, 0
    %v514 = vsel %vm113, %v475, 0
    %v517 = vsel %vm113, %v476, 0
    %v520 = vsel %vm113, %v477, 0
    %v523 = vsel %vm113, %v478, 0
    %v526 = vsel %vm113, %v479, 0
    %v529 = vsel %vm113, %v480, 0
    %v532 = vsel %vm113, %v481, 0
    %v535 = vsel %vm113, %v482, 0
    %v538 = vsel %vm113, %v483, 0
    %v541 = vsel %vm113, %v484, 0
    %v544 = vsel %vm113, %v485, 0
    %v547 = vsel %vm113, %v486, 0
    %v550 = vsel %vm113, %v487, 0
    %v553 = vsel %vm113, %v488, 0
    %v556 = vsel %vm113, %v489, 0
    %v559 = vsel %vm113, %v490, 0
    %v562 = vsel %vm113, %v491, 0
    %564 = vmatprep.subr.mxu0 0.0
    %565 = vmatpush1.xpose.msra.mxu0 %v562
    %566 = vmatprep.subr.mxu0 0.0
    %567 = vmatpush1.xpose.msra.mxu0 %v559
    %568 = vmatprep.subr.mxu0 0.0
    %569 = vmatpush1.xpose.msra.mxu0 %v556
    %570 = vmatprep.subr.mxu0 0.0
    %571 = vmatpush1.xpose.msra.mxu0 %v553
    %572 = vmatprep.subr.mxu0 0.0
    %573 = vmatpush1.xpose.msra.mxu0 %v550
    %574 = vmatprep.subr.mxu0 0.0
    %575 = vmatpush1.xpose.msra.mxu0 %v547
    %576 = vmatprep.subr.mxu0 0.0
    %577 = vmatpush1.xpose.msra.mxu0 %v544
    %578 = vmatprep.subr.mxu0 0.0
    %579 = vmatpush1.xpose.msra.mxu0 %v541
    %580 = vmatprep.subr.mxu0 0.0
    %581 = vmatpush1.xpose.msra.mxu0 %v538
    %582 = vmatprep.subr.mxu0 0.0
    %583 = vmatpush1.xpose.msra.mxu0 %v535
    %584 = vmatprep.subr.mxu0 0.0
    %585 = vmatpush1.xpose.msra.mxu0 %v532
    %586 = vmatprep.subr.mxu0 0.0
    %587 = vmatpush1.xpose.msra.mxu0 %v529
    %588 = vmatprep.subr.mxu0 0.0
    %589 = vmatpush1.xpose.msra.mxu0 %v526
    %590 = vmatprep.subr.mxu0 0.0
    %591 = vmatpush1.xpose.msra.mxu0 %v523
    %592 = vmatprep.subr.mxu0 0.0
    %593 = vmatpush1.xpose.msra.mxu0 %v520
    %594 = vmatprep.subr.mxu0 0.0
    %595 = vmatpush1.xpose.msra.mxu0 %v517
    %596 = vmatprep.subr.mxu0 0.0
    %597 = vmatpush2.xpose.msra.mxu0 0.0
    %598 = vmatprep.subr.mxu0 0.0
    %599 = vmatpush2.xpose.msra.mxu0 0.0
    %600 = vmatprep.subr.mxu0 0.0
    %601 = vmatpush2.xpose.msra.mxu0 0.0
    %602 = vmatprep.subr.mxu0 0.0
    %603 = vmatpush2.xpose.msra.mxu0 0.0
    %604 = vmatprep.subr.mxu0 0.0
    %605 = vmatpush2.xpose.msra.mxu0 0.0
    %606 = vmatprep.subr.mxu0 0.0
    %607 = vmatpush2.xpose.msra.mxu0 0.0
    %608 = vmatprep.subr.mxu0 0.0
    %609 = vmatpush2.xpose.msra.mxu0 0.0
    %610 = vmatprep.subr.mxu0 0.0
    %611 = vmatpush2.xpose.msra.mxu0 0.0
    %612 = vmatprep.subr.mxu0 0.0
    %613 = vmatpush2.xpose.msra.mxu0 0.0
    %614 = vmatprep.subr.mxu0 0.0
    %615 = vmatpush2.xpose.msra.mxu0 0.0
    %616 = vmatprep.subr.mxu0 0.0
    %617 = vmatpush2.xpose.msra.mxu0 0.0
    %618 = vmatprep.subr.mxu0 0.0
    %619 = vmatpush2.xpose.msra.mxu0 0.0
    %620 = vmatprep.subr.mxu0 0.0
    %621 = vmatpush2.xpose.msra.mxu0 0.0
    %622 = vmatprep.subr.mxu0 0.0
    %623 = vmatpush2.xpose.msra.mxu0 0.0
    %624 = vmatprep.subr.mxu0 0.0
    %625 = vmatpush2.xpose.msra.mxu0 0.0
    %626 = vmatprep.subr.mxu0 0.0
    %627 = vmatpush2.xpose.msra.mxu0 0.0
    %628 = vmatprep.mubr.f32.mxu0 0.0
    %629 = vmatmul.mubr.f32.gmra.mxu0 %v493
    %v630 = vpop.f32.mrf.mxu0
    %v631 = vadd.f32 0.0, %v630
    %v632 = vpop.f32.mrf.mxu0
    %633 = vmatprep.mubr.f32.mxu0 0.0
    %634 = vmatmul.mubr.f32.gmra.mxu0 %v496
    %v635 = vpop.f32.mrf.mxu0
    %v636 = vadd.f32 0.0, %v635
    %v637 = vpop.f32.mrf.mxu0
    %638 = vmatprep.mubr.f32.mxu0 0.0
    %639 = vmatmul.mubr.f32.gmra.mxu0 %v499
    %v640 = vpop.f32.mrf.mxu0
    %v641 = vadd.f32 0.0, %v640
    %v642 = vpop.f32.mrf.mxu0
    %643 = vmatprep.mubr.f32.mxu0 0.0
    %644 = vmatmul.mubr.f32.gmra.mxu0 %v502
    %v645 = vpop.f32.mrf.mxu0
    %v646 = vadd.f32 0.0, %v645
    %v647 = vpop.f32.mrf.mxu0
    %648 = vmatprep.mubr.f32.mxu0 0.0
    %649 = vmatmul.mubr.f32.gmra.mxu0 %v505
    %v650 = vpop.f32.mrf.mxu0
    %v651 = vadd.f32 0.0, %v650
    %v652 = vpop.f32.mrf.mxu0
    %653 = vmatprep.mubr.f32.mxu0 0.0
    %654 = vmatmul.mubr.f32.gmra.mxu0 %v508
    %v655 = vpop.f32.mrf.mxu0
    %v656 = vadd.f32 0.0, %v655
    %v657 = vpop.f32.mrf.mxu0
    %658 = vmatprep.mubr.f32.mxu0 0.0
    %659 = vmatmul.mubr.f32.gmra.mxu0 %v511
    %v660 = vpop.f32.mrf.mxu0
    %v661 = vadd.f32 0.0, %v660
    %v662 = vpop.f32.mrf.mxu0
    %663 = vmatprep.mubr.f32.mxu0 0.0
    %664 = vmatmul.mubr.f32.gmra.mxu0 %v514
    %v665 = vpop.f32.mrf.mxu0
    %v666 = vadd.f32 0.0, %v665
    %v667 = vpop.f32.mrf.mxu0
    %668 = vdwg.mxu0
    %v669 = vadd.f32 %v430, %v631
    %v670 = vadd.f32 %v435, %v636
    %v671 = vadd.f32 %v440, %v641
    %v672 = vadd.f32 %v445, %v646
    %v673 = vadd.f32 %v450, %v651
    %v674 = vadd.f32 %v455, %v656
    %v675 = vadd.f32 %v460, %v661
    %v676 = vadd.f32 %v465, %v666
    %v677 = vld [vmem:[%s9] sm:$0xff]
    %v678 = vld [vmem:[%s9 + $0x8] sm:$0xff]
    %v679 = vld [vmem:[%s9 + $0x10] sm:$0xff]
    %v680 = vld [vmem:[%s9 + $0x18] sm:$0xff]
    %v681 = vld [vmem:[%s9 + $0x20] sm:$0xff]
    %v682 = vld [vmem:[%s9 + $0x28] sm:$0xff]
    %v683 = vld [vmem:[%s9 + $0x30] sm:$0xff]
    %v684 = vld [vmem:[%s9 + $0x38] sm:$0xff]
    %v685 = vld [vmem:[%s3] sm:$0xff]
    %v686 = vld [vmem:[%s3 + $0x8] sm:$0xff]
    %v687 = vld [vmem:[%s3 + $0x10] sm:$0xff]
    %v688 = vld [vmem:[%s3 + $0x18] sm:$0xff]
    %v689 = vld [vmem:[%s3 + $0x20] sm:$0xff]
    %v690 = vld [vmem:[%s3 + $0x28] sm:$0xff]
    %v691 = vld [vmem:[%s3 + $0x30] sm:$0xff]
    %v692 = vld [vmem:[%s3 + $0x38] sm:$0xff]
    %v693 = vld [vmem:[%s3 + $0x40] sm:$0xff]
    %v694 = vld [vmem:[%s3 + $0x48] sm:$0xff]
    %v695 = vld [vmem:[%s3 + $0x50] sm:$0xff]
    %v696 = vld [vmem:[%s3 + $0x58] sm:$0xff]
    %v697 = vld [vmem:[%s3 + $0x60] sm:$0xff]
    %v698 = vld [vmem:[%s3 + $0x68] sm:$0xff]
    %v699 = vld [vmem:[%s3 + $0x70] sm:$0xff]
    %v700 = vld [vmem:[%s3 + $0x78] sm:$0xff]
    %vm701 = vcmask 64512
    %v703 = vsel %vm701, %v677, 0
    %v706 = vsel %vm701, %v678, 0
    %v709 = vsel %vm701, %v679, 0
    %v712 = vsel %vm701, %v680, 0
    %v715 = vsel %vm701, %v681, 0
    %v718 = vsel %vm701, %v682, 0
    %v721 = vsel %vm701, %v683, 0
    %v724 = vsel %vm701, %v684, 0
    %v727 = vsel %vm701, %v685, 0
    %v730 = vsel %vm701, %v686, 0
    %v733 = vsel %vm701, %v687, 0
    %v736 = vsel %vm701, %v688, 0
    %v739 = vsel %vm701, %v689, 0
    %v742 = vsel %vm701, %v690, 0
    %v745 = vsel %vm701, %v691, 0
    %v748 = vsel %vm701, %v692, 0
    %v751 = vsel %vm701, %v693, 0
    %v754 = vsel %vm701, %v694, 0
    %v757 = vsel %vm701, %v695, 0
    %v760 = vsel %vm701, %v696, 0
    %v763 = vsel %vm701, %v697, 0
    %v766 = vsel %vm701, %v698, 0
    %v769 = vsel %vm701, %v699, 0
    %v772 = vsel %vm701, %v700, 0
    %774 = vmatprep.subr.mxu0 0.0
    %775 = vmatpush1.xpose.msra.mxu0 %v772
    %776 = vmatprep.subr.mxu0 0.0
    %777 = vmatpush1.xpose.msra.mxu0 %v769
    %778 = vmatprep.subr.mxu0 0.0
    %779 = vmatpush1.xpose.msra.mxu0 %v766
    %780 = vmatprep.subr.mxu0 0.0
    %781 = vmatpush1.xpose.msra.mxu0 %v763
    %782 = vmatprep.subr.mxu0 0.0
    %783 = vmatpush1.xpose.msra.mxu0 %v760
    %784 = vmatprep.subr.mxu0 0.0
    %785 = vmatpush1.xpose.msra.mxu0 %v757
    %786 = vmatprep.subr.mxu0 0.0
    %787 = vmatpush1.xpose.msra.mxu0 %v754
    %788 = vmatprep.subr.mxu0 0.0
    %789 = vmatpush1.xpose.msra.mxu0 %v751
    %790 = vmatprep.subr.mxu0 0.0
    %791 = vmatpush1.xpose.msra.mxu0 %v748
    %792 = vmatprep.subr.mxu0 0.0
    %793 = vmatpush1.xpose.msra.mxu0 %v745
    %794 = vmatprep.subr.mxu0 0.0
    %795 = vmatpush1.xpose.msra.mxu0 %v742
    %796 = vmatprep.subr.mxu0 0.0
    %797 = vmatpush1.xpose.msra.mxu0 %v739
    %798 = vmatprep.subr.mxu0 0.0
    %799 = vmatpush1.xpose.msra.mxu0 %v736
    %800 = vmatprep.subr.mxu0 0.0
    %801 = vmatpush1.xpose.msra.mxu0 %v733
    %802 = vmatprep.subr.mxu0 0.0
    %803 = vmatpush1.xpose.msra.mxu0 %v730
    %804 = vmatprep.subr.mxu0 0.0
    %805 = vmatpush1.xpose.msra.mxu0 %v727
    %806 = vmatprep.subr.mxu0 0.0
    %807 = vmatpush2.xpose.msra.mxu0 0.0
    %808 = vmatprep.subr.mxu0 0.0
    %809 = vmatpush2.xpose.msra.mxu0 0.0
    %810 = vmatprep.subr.mxu0 0.0
    %811 = vmatpush2.xpose.msra.mxu0 0.0
    %812 = vmatprep.subr.mxu0 0.0
    %813 = vmatpush2.xpose.msra.mxu0 0.0
    %814 = vmatprep.subr.mxu0 0.0
    %815 = vmatpush2.xpose.msra.mxu0 0.0
    %816 = vmatprep.subr.mxu0 0.0
    %817 = vmatpush2.xpose.msra.mxu0 0.0
    %818 = vmatprep.subr.mxu0 0.0
    %819 = vmatpush2.xpose.msra.mxu0 0.0
    %820 = vmatprep.subr.mxu0 0.0
    %821 = vmatpush2.xpose.msra.mxu0 0.0
    %822 = vmatprep.subr.mxu0 0.0
    %823 = vmatpush2.xpose.msra.mxu0 0.0
    %824 = vmatprep.subr.mxu0 0.0
    %825 = vmatpush2.xpose.msra.mxu0 0.0
    %826 = vmatprep.subr.mxu0 0.0
    %827 = vmatpush2.xpose.msra.mxu0 0.0
    %828 = vmatprep.subr.mxu0 0.0
    %829 = vmatpush2.xpose.msra.mxu0 0.0
    %830 = vmatprep.subr.mxu0 0.0
    %831 = vmatpush2.xpose.msra.mxu0 0.0
    %832 = vmatprep.subr.mxu0 0.0
    %833 = vmatpush2.xpose.msra.mxu0 0.0
    %834 = vmatprep.subr.mxu0 0.0
    %835 = vmatpush2.xpose.msra.mxu0 0.0
    %836 = vmatprep.subr.mxu0 0.0
    %837 = vmatpush2.xpose.msra.mxu0 0.0
    %838 = vmatprep.mubr.f32.mxu0 0.0
    %839 = vmatmul.mubr.f32.gmra.mxu0 %v703
    %v840 = vpop.f32.mrf.mxu0
    %v841 = vadd.f32 0.0, %v840
    %v842 = vpop.f32.mrf.mxu0
    %843 = vmatprep.mubr.f32.mxu0 0.0
    %844 = vmatmul.mubr.f32.gmra.mxu0 %v706
    %v845 = vpop.f32.mrf.mxu0
    %v846 = vadd.f32 0.0, %v845
    %v847 = vpop.f32.mrf.mxu0
    %848 = vmatprep.mubr.f32.mxu0 0.0
    %849 = vmatmul.mubr.f32.gmra.mxu0 %v709
    %v850 = vpop.f32.mrf.mxu0
    %v851 = vadd.f32 0.0, %v850
    %v852 = vpop.f32.mrf.mxu0
    %853 = vmatprep.mubr.f32.mxu0 0.0
    %854 = vmatmul.mubr.f32.gmra.mxu0 %v712
    %v855 = vpop.f32.mrf.mxu0
    %v856 = vadd.f32 0.0, %v855
    %v857 = vpop.f32.mrf.mxu0
    %858 = vmatprep.mubr.f32.mxu0 0.0
    %859 = vmatmul.mubr.f32.gmra.mxu0 %v715
    %v860 = vpop.f32.mrf.mxu0
    %v861 = vadd.f32 0.0, %v860
    %v862 = vpop.f32.mrf.mxu0
    %863 = vmatprep.mubr.f32.mxu0 0.0
    %864 = vmatmul.mubr.f32.gmra.mxu0 %v718
    %v865 = vpop.f32.mrf.mxu0
    %v866 = vadd.f32 0.0, %v865
    %v867 = vpop.f32.mrf.mxu0
    %868 = vmatprep.mubr.f32.mxu0 0.0
    %869 = vmatmul.mubr.f32.gmra.mxu0 %v721
    %v870 = vpop.f32.mrf.mxu0
    %v871 = vadd.f32 0.0, %v870
    %v872 = vpop.f32.mrf.mxu0
    %873 = vmatprep.mubr.f32.mxu0 0.0
    %874 = vmatmul.mubr.f32.gmra.mxu0 %v724
    %v875 = vpop.f32.mrf.mxu0
    %v876 = vadd.f32 0.0, %v875
    %v877 = vpop.f32.mrf.mxu0
    %878 = vdwg.mxu0
    %v879 = vadd.f32 %v669, %v841
    %v880 = vadd.f32 %v670, %v846
    %v881 = vadd.f32 %v671, %v851
    %v882 = vadd.f32 %v672, %v856
    %v883 = vadd.f32 %v673, %v861
    %v884 = vadd.f32 %v674, %v866
    %v885 = vadd.f32 %v675, %v871
    %v886 = vadd.f32 %v676, %v876
    %v887 = vld [vmem:[%s10] sm:$0xff]
    %v888 = vld [vmem:[%s10 + $0x8] sm:$0xff]
    %v889 = vld [vmem:[%s10 + $0x10] sm:$0xff]
    %v890 = vld [vmem:[%s10 + $0x18] sm:$0xff]
    %v891 = vld [vmem:[%s10 + $0x20] sm:$0xff]
    %v892 = vld [vmem:[%s10 + $0x28] sm:$0xff]
    %v893 = vld [vmem:[%s10 + $0x30] sm:$0xff]
    %v894 = vld [vmem:[%s10 + $0x38] sm:$0xff]
    %v895 = vld [vmem:[%s4] sm:$0xff]
    %v896 = vld [vmem:[%s4 + $0x8] sm:$0xff]
    %v897 = vld [vmem:[%s4 + $0x10] sm:$0xff]
    %v898 = vld [vmem:[%s4 + $0x18] sm:$0xff]
    %v899 = vld [vmem:[%s4 + $0x20] sm:$0xff]
    %v900 = vld [vmem:[%s4 + $0x28] sm:$0xff]
    %v901 = vld [vmem:[%s4 + $0x30] sm:$0xff]
    %v902 = vld [vmem:[%s4 + $0x38] sm:$0xff]
    %v903 = vld [vmem:[%s4 + $0x40] sm:$0xff]
    %v904 = vld [vmem:[%s4 + $0x48] sm:$0xff]
    %v905 = vld [vmem:[%s4 + $0x50] sm:$0xff]
    %v906 = vld [vmem:[%s4 + $0x58] sm:$0xff]
    %v907 = vld [vmem:[%s4 + $0x60] sm:$0xff]
    %v908 = vld [vmem:[%s4 + $0x68] sm:$0xff]
    %v909 = vld [vmem:[%s4 + $0x70] sm:$0xff]
    %v910 = vld [vmem:[%s4 + $0x78] sm:$0xff]
    %v912 = vsel %vm701, %v887, 0
    %v915 = vsel %vm701, %v888, 0
    %v918 = vsel %vm701, %v889, 0
    %v921 = vsel %vm701, %v890, 0
    %v924 = vsel %vm701, %v891, 0
    %v927 = vsel %vm701, %v892, 0
    %v930 = vsel %vm701, %v893, 0
    %v933 = vsel %vm701, %v894, 0
    %v936 = vsel %vm701, %v895, 0
    %v939 = vsel %vm701, %v896, 0
    %v942 = vsel %vm701, %v897, 0
    %v945 = vsel %vm701, %v898, 0
    %v948 = vsel %vm701, %v899, 0
    %v951 = vsel %vm701, %v900, 0
    %v954 = vsel %vm701, %v901, 0
    %v957 = vsel %vm701, %v902, 0
    %v960 = vsel %vm701, %v903, 0
    %v963 = vsel %vm701, %v904, 0
    %v966 = vsel %vm701, %v905, 0
    %v969 = vsel %vm701, %v906, 0
    %v972 = vsel %vm701, %v907, 0
    %v975 = vsel %vm701, %v908, 0
    %v978 = vsel %vm701, %v909, 0
    %v981 = vsel %vm701, %v910, 0
    %983 = vmatprep.subr.mxu0 0.0
    %984 = vmatpush1.xpose.msra.mxu0 %v981
    %985 = vmatprep.subr.mxu0 0.0
    %986 = vmatpush1.xpose.msra.mxu0 %v978
    %987 = vmatprep.subr.mxu0 0.0
    %988 = vmatpush1.xpose.msra.mxu0 %v975
    %989 = vmatprep.subr.mxu0 0.0
    %990 = vmatpush1.xpose.msra.mxu0 %v972
    %991 = vmatprep.subr.mxu0 0.0
    %992 = vmatpush1.xpose.msra.mxu0 %v969
    %993 = vmatprep.subr.mxu0 0.0
    %994 = vmatpush1.xpose.msra.mxu0 %v966
    %995 = vmatprep.subr.mxu0 0.0
    %996 = vmatpush1.xpose.msra.mxu0 %v963
    %997 = vmatprep.subr.mxu0 0.0
    %998 = vmatpush1.xpose.msra.mxu0 %v960
    %999 = vmatprep.subr.mxu0 0.0
    %1000 = vmatpush1.xpose.msra.mxu0 %v957
    %1001 = vmatprep.subr.mxu0 0.0
    %1002 = vmatpush1.xpose.msra.mxu0 %v954
    %1003 = vmatprep.subr.mxu0 0.0
    %1004 = vmatpush1.xpose.msra.mxu0 %v951
    %1005 = vmatprep.subr.mxu0 0.0
    %1006 = vmatpush1.xpose.msra.mxu0 %v948
    %1007 = vmatprep.subr.mxu0 0.0
    %1008 = vmatpush1.xpose.msra.mxu0 %v945
    %1009 = vmatprep.subr.mxu0 0.0
    %1010 = vmatpush1.xpose.msra.mxu0 %v942
    %1011 = vmatprep.subr.mxu0 0.0
    %1012 = vmatpush1.xpose.msra.mxu0 %v939
    %1013 = vmatprep.subr.mxu0 0.0
    %1014 = vmatpush1.xpose.msra.mxu0 %v936
    %1015 = vmatprep.subr.mxu0 0.0
    %1016 = vmatpush2.xpose.msra.mxu0 0.0
    %1017 = vmatprep.subr.mxu0 0.0
    %1018 = vmatpush2.xpose.msra.mxu0 0.0
    %1019 = vmatprep.subr.mxu0 0.0
    %1020 = vmatpush2.xpose.msra.mxu0 0.0
    %1021 = vmatprep.subr.mxu0 0.0
    %1022 = vmatpush2.xpose.msra.mxu0 0.0
    %1023 = vmatprep.subr.mxu0 0.0
    %1024 = vmatpush2.xpose.msra.mxu0 0.0
    %1025 = vmatprep.subr.mxu0 0.0
    %1026 = vmatpush2.xpose.msra.mxu0 0.0
    %1027 = vmatprep.subr.mxu0 0.0
    %1028 = vmatpush2.xpose.msra.mxu0 0.0
    %1029 = vmatprep.subr.mxu0 0.0
    %1030 = vmatpush2.xpose.msra.mxu0 0.0
    %1031 = vmatprep.subr.mxu0 0.0
    %1032 = vmatpush2.xpose.msra.mxu0 0.0
    %1033 = vmatprep.subr.mxu0 0.0
    %1034 = vmatpush2.xpose.msra.mxu0 0.0
    %1035 = vmatprep.subr.mxu0 0.0
    %1036 = vmatpush2.xpose.msra.mxu0 0.0
    %1037 = vmatprep.subr.mxu0 0.0
    %1038 = vmatpush2.xpose.msra.mxu0 0.0
    %1039 = vmatprep.subr.mxu0 0.0
    %1040 = vmatpush2.xpose.msra.mxu0 0.0
    %1041 = vmatprep.subr.mxu0 0.0
    %1042 = vmatpush2.xpose.msra.mxu0 0.0
    %1043 = vmatprep.subr.mxu0 0.0
    %1044 = vmatpush2.xpose.msra.mxu0 0.0
    %1045 = vmatprep.subr.mxu0 0.0
    %1046 = vmatpush2.xpose.msra.mxu0 0.0
    %1047 = vmatprep.mubr.f32.mxu0 0.0
    %1048 = vmatmul.mubr.f32.gmra.mxu0 %v912
    %v1049 = vpop.f32.mrf.mxu0
    %v1050 = vadd.f32 0.0, %v1049
    %v1051 = vpop.f32.mrf.mxu0
    %1052 = vmatprep.mubr.f32.mxu0 0.0
    %1053 = vmatmul.mubr.f32.gmra.mxu0 %v915
    %v1054 = vpop.f32.mrf.mxu0
    %v1055 = vadd.f32 0.0, %v1054
    %v1056 = vpop.f32.mrf.mxu0
    %1057 = vmatprep.mubr.f32.mxu0 0.0
    %1058 = vmatmul.mubr.f32.gmra.mxu0 %v918
    %v1059 = vpop.f32.mrf.mxu0
    %v1060 = vadd.f32 0.0, %v1059
    %v1061 = vpop.f32.mrf.mxu0
    %1062 = vmatprep.mubr.f32.mxu0 0.0
    %1063 = vmatmul.mubr.f32.gmra.mxu0 %v921
    %v1064 = vpop.f32.mrf.mxu0
    %v1065 = vadd.f32 0.0, %v1064
    %v1066 = vpop.f32.mrf.mxu0
    %1067 = vmatprep.mubr.f32.mxu0 0.0
    %1068 = vmatmul.mubr.f32.gmra.mxu0 %v924
    %v1069 = vpop.f32.mrf.mxu0
    %v1070 = vadd.f32 0.0, %v1069
    %v1071 = vpop.f32.mrf.mxu0
    %1072 = vmatprep.mubr.f32.mxu0 0.0
    %1073 = vmatmul.mubr.f32.gmra.mxu0 %v927
    %v1074 = vpop.f32.mrf.mxu0
    %v1075 = vadd.f32 0.0, %v1074
    %v1076 = vpop.f32.mrf.mxu0
    %1077 = vmatprep.mubr.f32.mxu0 0.0
    %1078 = vmatmul.mubr.f32.gmra.mxu0 %v930
    %v1079 = vpop.f32.mrf.mxu0
    %v1080 = vadd.f32 0.0, %v1079
    %v1081 = vpop.f32.mrf.mxu0
    %1082 = vmatprep.mubr.f32.mxu0 0.0
    %1083 = vmatmul.mubr.f32.gmra.mxu0 %v933
    %v1084 = vpop.f32.mrf.mxu0
    %v1085 = vadd.f32 0.0, %v1084
    %v1086 = vpop.f32.mrf.mxu0
    %1087 = vdwg.mxu0
    %v1088 = vadd.f32 %v879, %v1050
    %v1089 = vadd.f32 %v880, %v1055
    %v1090 = vadd.f32 %v881, %v1060
    %v1091 = vadd.f32 %v882, %v1065
    %v1092 = vadd.f32 %v883, %v1070
    %v1093 = vadd.f32 %v884, %v1075
    %v1094 = vadd.f32 %v885, %v1080
    %v1095 = vadd.f32 %v886, %v1085
    %v1096 = vld [vmem:[%s11] sm:$0xff]
    %v1097 = vld [vmem:[%s11 + $0x8] sm:$0xff]
    %v1098 = vld [vmem:[%s11 + $0x10] sm:$0xff]
    %v1099 = vld [vmem:[%s11 + $0x18] sm:$0xff]
    %v1100 = vld [vmem:[%s11 + $0x20] sm:$0xff]
    %v1101 = vld [vmem:[%s11 + $0x28] sm:$0xff]
    %v1102 = vld [vmem:[%s11 + $0x30] sm:$0xff]
    %v1103 = vld [vmem:[%s11 + $0x38] sm:$0xff]
    %v1104 = vld [vmem:[%s5] sm:$0xff]
    %v1105 = vld [vmem:[%s5 + $0x8] sm:$0xff]
    %v1106 = vld [vmem:[%s5 + $0x10] sm:$0xff]
    %v1107 = vld [vmem:[%s5 + $0x18] sm:$0xff]
    %v1108 = vld [vmem:[%s5 + $0x20] sm:$0xff]
    %v1109 = vld [vmem:[%s5 + $0x28] sm:$0xff]
    %v1110 = vld [vmem:[%s5 + $0x30] sm:$0xff]
    %v1111 = vld [vmem:[%s5 + $0x38] sm:$0xff]
    %v1112 = vld [vmem:[%s5 + $0x40] sm:$0xff]
    %v1113 = vld [vmem:[%s5 + $0x48] sm:$0xff]
    %v1114 = vld [vmem:[%s5 + $0x50] sm:$0xff]
    %v1115 = vld [vmem:[%s5 + $0x58] sm:$0xff]
    %v1116 = vld [vmem:[%s5 + $0x60] sm:$0xff]
    %v1117 = vld [vmem:[%s5 + $0x68] sm:$0xff]
    %v1118 = vld [vmem:[%s5 + $0x70] sm:$0xff]
    %v1119 = vld [vmem:[%s5 + $0x78] sm:$0xff]
    %v1121 = vsel %vm701, %v1096, 0
    %v1124 = vsel %vm701, %v1097, 0
    %v1127 = vsel %vm701, %v1098, 0
    %v1130 = vsel %vm701, %v1099, 0
    %v1133 = vsel %vm701, %v1100, 0
    %v1136 = vsel %vm701, %v1101, 0
    %v1139 = vsel %vm701, %v1102, 0
    %v1142 = vsel %vm701, %v1103, 0
    %v1145 = vsel %vm701, %v1104, 0
    %v1148 = vsel %vm701, %v1105, 0
    %v1151 = vsel %vm701, %v1106, 0
    %v1154 = vsel %vm701, %v1107, 0
    %v1157 = vsel %vm701, %v1108, 0
    %v1160 = vsel %vm701, %v1109, 0
    %v1163 = vsel %vm701, %v1110, 0
    %v1166 = vsel %vm701, %v1111, 0
    %v1169 = vsel %vm701, %v1112, 0
    %v1172 = vsel %vm701, %v1113, 0
    %v1175 = vsel %vm701, %v1114, 0
    %v1178 = vsel %vm701, %v1115, 0
    %v1181 = vsel %vm701, %v1116, 0
    %v1184 = vsel %vm701, %v1117, 0
    %v1187 = vsel %vm701, %v1118, 0
    %v1190 = vsel %vm701, %v1119, 0
    %1192 = vmatprep.subr.mxu0 0.0
    %1193 = vmatpush1.xpose.msra.mxu0 %v1190
    %1194 = vmatprep.subr.mxu0 0.0
    %1195 = vmatpush1.xpose.msra.mxu0 %v1187
    %1196 = vmatprep.subr.mxu0 0.0
    %1197 = vmatpush1.xpose.msra.mxu0 %v1184
    %1198 = vmatprep.subr.mxu0 0.0
    %1199 = vmatpush1.xpose.msra.mxu0 %v1181
    %1200 = vmatprep.subr.mxu0 0.0
    %1201 = vmatpush1.xpose.msra.mxu0 %v1178
    %1202 = vmatprep.subr.mxu0 0.0
    %1203 = vmatpush1.xpose.msra.mxu0 %v1175
    %1204 = vmatprep.subr.mxu0 0.0
    %1205 = vmatpush1.xpose.msra.mxu0 %v1172
    %1206 = vmatprep.subr.mxu0 0.0
    %1207 = vmatpush1.xpose.msra.mxu0 %v1169
    %1208 = vmatprep.subr.mxu0 0.0
    %1209 = vmatpush1.xpose.msra.mxu0 %v1166
    %1210 = vmatprep.subr.mxu0 0.0
    %1211 = vmatpush1.xpose.msra.mxu0 %v1163
    %1212 = vmatprep.subr.mxu0 0.0
    %1213 = vmatpush1.xpose.msra.mxu0 %v1160
    %1214 = vmatprep.subr.mxu0 0.0
    %1215 = vmatpush1.xpose.msra.mxu0 %v1157
    %1216 = vmatprep.subr.mxu0 0.0
    %1217 = vmatpush1.xpose.msra.mxu0 %v1154
    %1218 = vmatprep.subr.mxu0 0.0
    %1219 = vmatpush1.xpose.msra.mxu0 %v1151
    %1220 = vmatprep.subr.mxu0 0.0
    %1221 = vmatpush1.xpose.msra.mxu0 %v1148
    %1222 = vmatprep.subr.mxu0 0.0
    %1223 = vmatpush1.xpose.msra.mxu0 %v1145
    %1224 = vmatprep.subr.mxu0 0.0
    %1225 = vmatpush2.xpose.msra.mxu0 0.0
    %1226 = vmatprep.subr.mxu0 0.0
    %1227 = vmatpush2.xpose.msra.mxu0 0.0
    %1228 = vmatprep.subr.mxu0 0.0
    %1229 = vmatpush2.xpose.msra.mxu0 0.0
    %1230 = vmatprep.subr.mxu0 0.0
    %1231 = vmatpush2.xpose.msra.mxu0 0.0
    %1232 = vmatprep.subr.mxu0 0.0
    %1233 = vmatpush2.xpose.msra.mxu0 0.0
    %1234 = vmatprep.subr.mxu0 0.0
    %1235 = vmatpush2.xpose.msra.mxu0 0.0
    %1236 = vmatprep.subr.mxu0 0.0
    %1237 = vmatpush2.xpose.msra.mxu0 0.0
    %1238 = vmatprep.subr.mxu0 0.0
    %1239 = vmatpush2.xpose.msra.mxu0 0.0
    %1240 = vmatprep.subr.mxu0 0.0
    %1241 = vmatpush2.xpose.msra.mxu0 0.0
    %1242 = vmatprep.subr.mxu0 0.0
    %1243 = vmatpush2.xpose.msra.mxu0 0.0
    %1244 = vmatprep.subr.mxu0 0.0
    %1245 = vmatpush2.xpose.msra.mxu0 0.0
    %1246 = vmatprep.subr.mxu0 0.0
    %1247 = vmatpush2.xpose.msra.mxu0 0.0
    %1248 = vmatprep.subr.mxu0 0.0
    %1249 = vmatpush2.xpose.msra.mxu0 0.0
    %1250 = vmatprep.subr.mxu0 0.0
    %1251 = vmatpush2.xpose.msra.mxu0 0.0
    %1252 = vmatprep.subr.mxu0 0.0
    %1253 = vmatpush2.xpose.msra.mxu0 0.0
    %1254 = vmatprep.subr.mxu0 0.0
    %1255 = vmatpush2.xpose.msra.mxu0 0.0
    %1256 = vmatprep.mubr.f32.mxu0 0.0
    %1257 = vmatmul.mubr.f32.gmra.mxu0 %v1121
    %v1258 = vpop.f32.mrf.mxu0
    %v1259 = vadd.f32 0.0, %v1258
    %v1260 = vpop.f32.mrf.mxu0
    %1261 = vmatprep.mubr.f32.mxu0 0.0
    %1262 = vmatmul.mubr.f32.gmra.mxu0 %v1124
    %v1263 = vpop.f32.mrf.mxu0
    %v1264 = vadd.f32 0.0, %v1263
    %v1265 = vpop.f32.mrf.mxu0
    %1266 = vmatprep.mubr.f32.mxu0 0.0
    %1267 = vmatmul.mubr.f32.gmra.mxu0 %v1127
    %v1268 = vpop.f32.mrf.mxu0
    %v1269 = vadd.f32 0.0, %v1268
    %v1270 = vpop.f32.mrf.mxu0
    %1271 = vmatprep.mubr.f32.mxu0 0.0
    %1272 = vmatmul.mubr.f32.gmra.mxu0 %v1130
    %v1273 = vpop.f32.mrf.mxu0
    %v1274 = vadd.f32 0.0, %v1273
    %v1275 = vpop.f32.mrf.mxu0
    %1276 = vmatprep.mubr.f32.mxu0 0.0
    %1277 = vmatmul.mubr.f32.gmra.mxu0 %v1133
    %v1278 = vpop.f32.mrf.mxu0
    %v1279 = vadd.f32 0.0, %v1278
    %v1280 = vpop.f32.mrf.mxu0
    %1281 = vmatprep.mubr.f32.mxu0 0.0
    %1282 = vmatmul.mubr.f32.gmra.mxu0 %v1136
    %v1283 = vpop.f32.mrf.mxu0
    %v1284 = vadd.f32 0.0, %v1283
    %v1285 = vpop.f32.mrf.mxu0
    %1286 = vmatprep.mubr.f32.mxu0 0.0
    %1287 = vmatmul.mubr.f32.gmra.mxu0 %v1139
    %v1288 = vpop.f32.mrf.mxu0
    %v1289 = vadd.f32 0.0, %v1288
    %v1290 = vpop.f32.mrf.mxu0
    %1291 = vmatprep.mubr.f32.mxu0 0.0
    %1292 = vmatmul.mubr.f32.gmra.mxu0 %v1142
    %v1293 = vpop.f32.mrf.mxu0
    %v1294 = vadd.f32 0.0, %v1293
    %v1295 = vpop.f32.mrf.mxu0
    %1296 = vdwg.mxu0
    %v1297 = vadd.f32 %v1088, %v1259
    %v1298 = vadd.f32 %v1089, %v1264
    %v1299 = vadd.f32 %v1090, %v1269
    %v1300 = vadd.f32 %v1091, %v1274
    %v1301 = vadd.f32 %v1092, %v1279
    %v1302 = vadd.f32 %v1093, %v1284
    %v1303 = vadd.f32 %v1094, %v1289
    %v1304 = vadd.f32 %v1095, %v1294
    %v1305 = vld [vmem:[%s12] sm:$0xff]
    %v1306 = vld [vmem:[%s12 + $0x8] sm:$0xff]
    %v1307 = vld [vmem:[%s12 + $0x10] sm:$0xff]
    %v1308 = vld [vmem:[%s12 + $0x18] sm:$0xff]
    %v1309 = vld [vmem:[%s12 + $0x20] sm:$0xff]
    %v1310 = vld [vmem:[%s12 + $0x28] sm:$0xff]
    %v1311 = vld [vmem:[%s12 + $0x30] sm:$0xff]
    %v1312 = vld [vmem:[%s12 + $0x38] sm:$0xff]
    %1314 = vset.pattern.permute.xlu0 0
    %1315 = vperm.xlu0 %1314, %v1305
    %v1316 = vpop.permute.xlu0 %1315
    %1319 = vset.pattern.permute.xlu0 0
    %1320 = vperm.xlu0 %1319, %v1306
    %v1321 = vpop.permute.xlu0 %1320
    %1324 = vset.pattern.permute.xlu0 0
    %1325 = vperm.xlu0 %1324, %v1307
    %v1326 = vpop.permute.xlu0 %1325
    %1329 = vset.pattern.permute.xlu0 0
    %1330 = vperm.xlu0 %1329, %v1308
    %v1331 = vpop.permute.xlu0 %1330
    %1334 = vset.pattern.permute.xlu0 0
    %1335 = vperm.xlu0 %1334, %v1309
    %v1336 = vpop.permute.xlu0 %1335
    %1339 = vset.pattern.permute.xlu0 0
    %1340 = vperm.xlu0 %1339, %v1310
    %v1341 = vpop.permute.xlu0 %1340
    %1344 = vset.pattern.permute.xlu0 0
    %1345 = vperm.xlu0 %1344, %v1311
    %v1346 = vpop.permute.xlu0 %1345
    %1349 = vset.pattern.permute.xlu0 0
    %1350 = vperm.xlu0 %1349, %v1312
    %v1351 = vpop.permute.xlu0 %1350
    %v1353 = vadd.f32 %v1297, %v1316
    %v1354 = vadd.f32 %v1298, %v1321
    %v1355 = vadd.f32 %v1299, %v1326
    %v1356 = vadd.f32 %v1300, %v1331
    %v1357 = vadd.f32 %v1301, %v1336
    %v1358 = vadd.f32 %v1302, %v1341
    %v1359 = vadd.f32 %v1303, %v1346
    %v1360 = vadd.f32 %v1304, %v1351
    %v1361 = vmax.f32 %v1353, 0.0
    %v1362 = vmax.f32 %v1354, 0.0
    %v1363 = vmax.f32 %v1355, 0.0
    %v1364 = vmax.f32 %v1356, 0.0
    %v1365 = vmax.f32 %v1357, 0.0
    %v1366 = vmax.f32 %v1358, 0.0
    %v1367 = vmax.f32 %v1359, 0.0
    %v1368 = vmax.f32 %v1360, 0.0
    %v1369 = vld [vmem:[%s13] sm:$0xff]
    %v1370 = vld [vmem:[%s13 + $0x8] sm:$0xff]
    %v1371 = vld [vmem:[%s13 + $0x10] sm:$0xff]
    %v1372 = vld [vmem:[%s13 + $0x18] sm:$0xff]
    %v1373 = vld [vmem:[%s13 + $0x20] sm:$0xff]
    %v1374 = vld [vmem:[%s13 + $0x28] sm:$0xff]
    %v1375 = vld [vmem:[%s13 + $0x30] sm:$0xff]
    %v1376 = vld [vmem:[%s13 + $0x38] sm:$0xff]
    %v1377 = vld [vmem:[%s14] sm:$0xff]
    %v1378 = vld [vmem:[%s14 + $0x8] sm:$0xff]
    %v1379 = vld [vmem:[%s14 + $0x10] sm:$0xff]
    %v1380 = vld [vmem:[%s14 + $0x18] sm:$0xff]
    %v1381 = vld [vmem:[%s14 + $0x20] sm:$0xff]
    %v1382 = vld [vmem:[%s14 + $0x28] sm:$0xff]
    %v1383 = vld [vmem:[%s14 + $0x30] sm:$0xff]
    %v1384 = vld [vmem:[%s14 + $0x38] sm:$0xff]
    %1386 = vset.pattern.permute.xlu0 0
    %1387 = vperm.xlu0 %1386, %v1377
    %v1388 = vpop.permute.xlu0 %1387
    %1391 = vset.pattern.permute.xlu0 0
    %1392 = vperm.xlu0 %1391, %v1378
    %v1393 = vpop.permute.xlu0 %1392
    %1396 = vset.pattern.permute.xlu0 0
    %1397 = vperm.xlu0 %1396, %v1379
    %v1398 = vpop.permute.xlu0 %1397
    %1401 = vset.pattern.permute.xlu0 0
    %1402 = vperm.xlu0 %1401, %v1380
    %v1403 = vpop.permute.xlu0 %1402
    %1406 = vset.pattern.permute.xlu0 0
    %1407 = vperm.xlu0 %1406, %v1381
    %v1408 = vpop.permute.xlu0 %1407
    %1411 = vset.pattern.permute.xlu0 0
    %1412 = vperm.xlu0 %1411, %v1382
    %v1413 = vpop.permute.xlu0 %1412
    %1416 = vset.pattern.permute.xlu0 0
    %1417 = vperm.xlu0 %1416, %v1383
    %v1418 = vpop.permute.xlu0 %1417
    %1421 = vset.pattern.permute.xlu0 0
    %1422 = vperm.xlu0 %1421, %v1384
    %v1423 = vpop.permute.xlu0 %1422
    %vm1425 = vcmask 523264
    %v1427 = vsel %vm1425, %v1369, 0
    %v1430 = vsel %vm1425, %v1370, 0
    %v1433 = vsel %vm1425, %v1371, 0
    %v1436 = vsel %vm1425, %v1372, 0
    %v1439 = vsel %vm1425, %v1373, 0
    %v1442 = vsel %vm1425, %v1374, 0
    %v1445 = vsel %vm1425, %v1375, 0
    %v1448 = vsel %vm1425, %v1376, 0
    %1450 = vmatprep.subr.mxu0 0.0
    %1451 = vmatpush1.msra.mxu0 0.0
    %1452 = vmatprep.subr.mxu0 0.0
    %1453 = vmatpush1.msra.mxu0 0.0
    %1454 = vmatprep.subr.mxu0 0.0
    %1455 = vmatpush1.msra.mxu0 0.0
    %1456 = vmatprep.subr.mxu0 0.0
    %1457 = vmatpush1.msra.mxu0 0.0
    %1458 = vmatprep.subr.mxu0 0.0
    %1459 = vmatpush1.msra.mxu0 0.0
    %1460 = vmatprep.subr.mxu0 0.0
    %1461 = vmatpush1.msra.mxu0 0.0
    %1462 = vmatprep.subr.mxu0 0.0
    %1463 = vmatpush1.msra.mxu0 0.0
    %1464 = vmatprep.subr.mxu0 0.0
    %1465 = vmatpush1.msra.mxu0 0.0
    %1466 = vmatprep.subr.mxu0 0.0
    %1467 = vmatpush1.msra.mxu0 %v1368
    %1468 = vmatprep.subr.mxu0 0.0
    %1469 = vmatpush1.msra.mxu0 %v1367
    %1470 = vmatprep.subr.mxu0 0.0
    %1471 = vmatpush1.msra.mxu0 %v1366
    %1472 = vmatprep.subr.mxu0 0.0
    %1473 = vmatpush1.msra.mxu0 %v1365
    %1474 = vmatprep.subr.mxu0 0.0
    %1475 = vmatpush1.msra.mxu0 %v1364
    %1476 = vmatprep.subr.mxu0 0.0
    %1477 = vmatpush1.msra.mxu0 %v1363
    %1478 = vmatprep.subr.mxu0 0.0
    %1479 = vmatpush1.msra.mxu0 %v1362
    %1480 = vmatprep.subr.mxu0 0.0
    %1481 = vmatpush1.msra.mxu0 %v1361
    %1482 = vmatprep.subr.mxu0 0.0
    %1483 = vmatpush2.msra.mxu0 0.0
    %1484 = vmatprep.subr.mxu0 0.0
    %1485 = vmatpush2.msra.mxu0 0.0
    %1486 = vmatprep.subr.mxu0 0.0
    %1487 = vmatpush2.msra.mxu0 0.0
    %1488 = vmatprep.subr.mxu0 0.0
    %1489 = vmatpush2.msra.mxu0 0.0
    %1490 = vmatprep.subr.mxu0 0.0
    %1491 = vmatpush2.msra.mxu0 0.0
    %1492 = vmatprep.subr.mxu0 0.0
    %1493 = vmatpush2.msra.mxu0 0.0
    %1494 = vmatprep.subr.mxu0 0.0
    %1495 = vmatpush2.msra.mxu0 0.0
    %1496 = vmatprep.subr.mxu0 0.0
    %1497 = vmatpush2.msra.mxu0 0.0
    %1498 = vmatprep.subr.mxu0 0.0
    %1499 = vmatpush2.msra.mxu0 0.0
    %1500 = vmatprep.subr.mxu0 0.0
    %1501 = vmatpush2.msra.mxu0 0.0
    %1502 = vmatprep.subr.mxu0 0.0
    %1503 = vmatpush2.msra.mxu0 0.0
    %1504 = vmatprep.subr.mxu0 0.0
    %1505 = vmatpush2.msra.mxu0 0.0
    %1506 = vmatprep.subr.mxu0 0.0
    %1507 = vmatpush2.msra.mxu0 0.0
    %1508 = vmatprep.subr.mxu0 0.0
    %1509 = vmatpush2.msra.mxu0 0.0
    %1510 = vmatprep.subr.mxu0 0.0
    %1511 = vmatpush2.msra.mxu0 0.0
    %1512 = vmatprep.subr.mxu0 0.0
    %1513 = vmatpush2.msra.mxu0 0.0
    %1514 = vmatprep.mubr.f32.mxu0 0.0
    %1515 = vmatmul.mubr.f32.gmra.mxu0 %v1427
    %v1516 = vpop.f32.mrf.mxu0
    %v1517 = vadd.f32 %v1388, %v1516
    %v1518 = vpop.f32.mrf.mxu0
    %1519 = vmatprep.mubr.f32.mxu0 0.0
    %1520 = vmatmul.mubr.f32.gmra.mxu0 %v1430
    %v1521 = vpop.f32.mrf.mxu0
    %v1522 = vadd.f32 %v1393, %v1521
    %v1523 = vpop.f32.mrf.mxu0
    %1524 = vmatprep.mubr.f32.mxu0 0.0
    %1525 = vmatmul.mubr.f32.gmra.mxu0 %v1433
    %v1526 = vpop.f32.mrf.mxu0
    %v1527 = vadd.f32 %v1398, %v1526
    %v1528 = vpop.f32.mrf.mxu0
    %1529 = vmatprep.mubr.f32.mxu0 0.0
    %1530 = vmatmul.mubr.f32.gmra.mxu0 %v1436
    %v1531 = vpop.f32.mrf.mxu0
    %v1532 = vadd.f32 %v1403, %v1531
    %v1533 = vpop.f32.mrf.mxu0
    %1534 = vmatprep.mubr.f32.mxu0 0.0
    %1535 = vmatmul.mubr.f32.gmra.mxu0 %v1439
    %v1536 = vpop.f32.mrf.mxu0
    %v1537 = vadd.f32 %v1408, %v1536
    %v1538 = vpop.f32.mrf.mxu0
    %1539 = vmatprep.mubr.f32.mxu0 0.0
    %1540 = vmatmul.mubr.f32.gmra.mxu0 %v1442
    %v1541 = vpop.f32.mrf.mxu0
    %v1542 = vadd.f32 %v1413, %v1541
    %v1543 = vpop.f32.mrf.mxu0
    %1544 = vmatprep.mubr.f32.mxu0 0.0
    %1545 = vmatmul.mubr.f32.gmra.mxu0 %v1445
    %v1546 = vpop.f32.mrf.mxu0
    %v1547 = vadd.f32 %v1418, %v1546
    %v1548 = vpop.f32.mrf.mxu0
    %1549 = vmatprep.mubr.f32.mxu0 0.0
    %1550 = vmatmul.mubr.f32.gmra.mxu0 %v1448
    %v1551 = vpop.f32.mrf.mxu0
    %v1552 = vadd.f32 %v1423, %v1551
    %v1553 = vpop.f32.mrf.mxu0
    %1554 = vdwg.mxu0
    %v1555 = vmax.f32 %v1517, 0.0
    %v1556 = vmax.f32 %v1522, 0.0
    %v1557 = vmax.f32 %v1527, 0.0
    %v1558 = vmax.f32 %v1532, 0.0
    %v1559 = vmax.f32 %v1537, 0.0
    %v1560 = vmax.f32 %v1542, 0.0
    %v1561 = vmax.f32 %v1547, 0.0
    %v1562 = vmax.f32 %v1552, 0.0
    %v1563 = vld [vmem:[%s15] sm:$0xff]
    %v1564 = vld [vmem:[%s15 + $0x8] sm:$0xff]
    %v1565 = vld [vmem:[%s15 + $0x10] sm:$0xff]
    %v1566 = vld [vmem:[%s15 + $0x18] sm:$0xff]
    %v1567 = vld [vmem:[%s16] sm:$0xff]
    %v1568 = vld [vmem:[%s16 + $0x8] sm:$0xff]
    %v1569 = vld [vmem:[%s16 + $0x10] sm:$0xff]
    %v1570 = vld [vmem:[%s16 + $0x18] sm:$0xff]
    %1572 = vset.pattern.permute.xlu0 0
    %1573 = vperm.xlu0 %1572, %v1567
    %v1574 = vpop.permute.xlu0 %1573
    %1577 = vset.pattern.permute.xlu0 0
    %1578 = vperm.xlu0 %1577, %v1568
    %v1579 = vpop.permute.xlu0 %1578
    %1582 = vset.pattern.permute.xlu0 0
    %1583 = vperm.xlu0 %1582, %v1569
    %v1584 = vpop.permute.xlu0 %1583
    %1587 = vset.pattern.permute.xlu0 0
    %1588 = vperm.xlu0 %1587, %v1570
    %v1589 = vpop.permute.xlu0 %1588
    %v1592 = vsel %vm1425, %v1563, 0
    %v1595 = vsel %vm1425, %v1564, 0
    %v1598 = vsel %vm1425, %v1565, 0
    %v1601 = vsel %vm1425, %v1566, 0
    %1603 = vmatprep.subr.mxu0 0.0
    %1604 = vmatpush1.msra.mxu0 0.0
    %1605 = vmatprep.subr.mxu0 0.0
    %1606 = vmatpush1.msra.mxu0 0.0
    %1607 = vmatprep.subr.mxu0 0.0
    %1608 = vmatpush1.msra.mxu0 0.0
    %1609 = vmatprep.subr.mxu0 0.0
    %1610 = vmatpush1.msra.mxu0 0.0
    %1611 = vmatprep.subr.mxu0 0.0
    %1612 = vmatpush1.msra.mxu0 0.0
    %1613 = vmatprep.subr.mxu0 0.0
    %1614 = vmatpush1.msra.mxu0 0.0
    %1615 = vmatprep.subr.mxu0 0.0
    %1616 = vmatpush1.msra.mxu0 0.0
    %1617 = vmatprep.subr.mxu0 0.0
    %1618 = vmatpush1.msra.mxu0 0.0
    %1619 = vmatprep.subr.mxu0 0.0
    %1620 = vmatpush1.msra.mxu0 %v1562
    %1621 = vmatprep.subr.mxu0 0.0
    %1622 = vmatpush1.msra.mxu0 %v1561
    %1623 = vmatprep.subr.mxu0 0.0
    %1624 = vmatpush1.msra.mxu0 %v1560
    %1625 = vmatprep.subr.mxu0 0.0
    %1626 = vmatpush1.msra.mxu0 %v1559
    %1627 = vmatprep.subr.mxu0 0.0
    %1628 = vmatpush1.msra.mxu0 %v1558
    %1629 = vmatprep.subr.mxu0 0.0
    %1630 = vmatpush1.msra.mxu0 %v1557
    %1631 = vmatprep.subr.mxu0 0.0
    %1632 = vmatpush1.msra.mxu0 %v1556
    %1633 = vmatprep.subr.mxu0 0.0
    %1634 = vmatpush1.msra.mxu0 %v1555
    %1635 = vmatprep.subr.mxu0 0.0
    %1636 = vmatpush2.msra.mxu0 0.0
    %1637 = vmatprep.subr.mxu0 0.0
    %1638 = vmatpush2.msra.mxu0 0.0
    %1639 = vmatprep.subr.mxu0 0.0
    %1640 = vmatpush2.msra.mxu0 0.0
    %1641 = vmatprep.subr.mxu0 0.0
    %1642 = vmatpush2.msra.mxu0 0.0
    %1643 = vmatprep.subr.mxu0 0.0
    %1644 = vmatpush2.msra.mxu0 0.0
    %1645 = vmatprep.subr.mxu0 0.0
    %1646 = vmatpush2.msra.mxu0 0.0
    %1647 = vmatprep.subr.mxu0 0.0
    %1648 = vmatpush2.msra.mxu0 0.0
    %1649 = vmatprep.subr.mxu0 0.0
    %1650 = vmatpush2.msra.mxu0 0.0
    %1651 = vmatprep.subr.mxu0 0.0
    %1652 = vmatpush2.msra.mxu0 0.0
    %1653 = vmatprep.subr.mxu0 0.0
    %1654 = vmatpush2.msra.mxu0 0.0
    %1655 = vmatprep.subr.mxu0 0.0
    %1656 = vmatpush2.msra.mxu0 0.0
    %1657 = vmatprep.subr.mxu0 0.0
    %1658 = vmatpush2.msra.mxu0 0.0
    %1659 = vmatprep.subr.mxu0 0.0
    %1660 = vmatpush2.msra.mxu0 0.0
    %1661 = vmatprep.subr.mxu0 0.0
    %1662 = vmatpush2.msra.mxu0 0.0
    %1663 = vmatprep.subr.mxu0 0.0
    %1664 = vmatpush2.msra.mxu0 0.0
    %1665 = vmatprep.subr.mxu0 0.0
    %1666 = vmatpush2.msra.mxu0 0.0
    %1667 = vmatprep.mubr.f32.mxu0 0.0
    %1668 = vmatmul.mubr.f32.gmra.mxu0 %v1592
    %v1669 = vpop.f32.mrf.mxu0
    %v1670 = vadd.f32 %v1574, %v1669
    %v1671 = vpop.f32.mrf.mxu0
    %1672 = vmatprep.mubr.f32.mxu0 0.0
    %1673 = vmatmul.mubr.f32.gmra.mxu0 %v1595
    %v1674 = vpop.f32.mrf.mxu0
    %v1675 = vadd.f32 %v1579, %v1674
    %v1676 = vpop.f32.mrf.mxu0
    %1677 = vmatprep.mubr.f32.mxu0 0.0
    %1678 = vmatmul.mubr.f32.gmra.mxu0 %v1598
    %v1679 = vpop.f32.mrf.mxu0
    %v1680 = vadd.f32 %v1584, %v1679
    %v1681 = vpop.f32.mrf.mxu0
    %1682 = vmatprep.mubr.f32.mxu0 0.0
    %1683 = vmatmul.mubr.f32.gmra.mxu0 %v1601
    %v1684 = vpop.f32.mrf.mxu0
    %v1685 = vadd.f32 %v1589, %v1684
    %v1686 = vpop.f32.mrf.mxu0
    %1687 = vdwg.mxu0
    %v1688 = vmax.f32 %v1670, 0.0
    %v1689 = vmax.f32 %v1675, 0.0
    %v1690 = vmax.f32 %v1680, 0.0
    %v1691 = vmax.f32 %v1685, 0.0
    %v1692 = vld [vmem:[%s17] sm:$0xff]
    %v1693 = vld [vmem:[%s17 + $0x8] sm:$0xff]
    %v1694 = vld [vmem:[%s17 + $0x10] sm:$0xff]
    %v1695 = vld [vmem:[%s17 + $0x18] sm:$0xff]
    %1697 = vset.pattern.permute.xlu0 0
    %1698 = vperm.xlu0 %1697, %v1692
    %v1699 = vpop.permute.xlu0 %1698
    %1702 = vset.pattern.permute.xlu0 0
    %1703 = vperm.xlu0 %1702, %v1693
    %v1704 = vpop.permute.xlu0 %1703
    %1707 = vset.pattern.permute.xlu0 0
    %1708 = vperm.xlu0 %1707, %v1694
    %v1709 = vpop.permute.xlu0 %1708
    %1712 = vset.pattern.permute.xlu0 0
    %1713 = vperm.xlu0 %1712, %v1695
    %v1714 = vpop.permute.xlu0 %1713
    %v1716 = vmul.f32 %v1699, %v1688
    %v1717 = vmul.f32 %v1704, %v1689
    %v1718 = vmul.f32 %v1709, %v1690
    %v1719 = vmul.f32 %v1714, %v1691
    %v1720 = vadd.f32 %v1716, %v1717
    %v1721 = vadd.f32 %v1720, %v1718
    %v1722 = vadd.f32 %v1721, %v1719
    %v1723 = vrot.slane %v1722, 4
    %v1724 = vadd.f32 %v1722, %v1723
    %v1725 = vrot.slane %v1724, 2
    %v1726 = vadd.f32 %v1724, %v1725
    %v1727 = vrot.slane %v1726, 1
    %v1728 = vadd.f32 %v1726, %v1727
    %v1729 = vld [vmem:[#allocation2] sm:$0x1]
    %1731 = vset.pattern.permute.xlu0 0
    %1732 = vperm.xlu0 %1731, %v1729
    %v1733 = vpop.permute.xlu0 %1732
    %v1735 = vlaneseq
    %v1736 = vshrl.u32 %v1735, 7
    %v1737 = vsub.s32 0, %v1736
    %v1738 = vrot.slane %v1733, %v1737
    %v1739 = vadd.f32 %v1728, %v1738
    %1740 = vst [vmem:[#allocation3] sm:$0x1] %v1739
    // Predicated region
    $region78: #{tpu_custom_call.1} parent=1 // pred_check
      _
    $region79: #{tpu_custom_call.1} parent=1 // pred_check_branch
      %1742 = sbr.rel (0) target = $region81
    $region80: #{tpu_custom_call.1} parent=1 // pred_region
      %s1744 = ssub.s32 16, 16
      %1745 = vsyncadd [#allocation4], %s1744
      %s1747 = sshll.u32 [#allocation3], 4
      %s1748 = int_to_ptr.vmem [resolvable:$true] %s1747
      %1750 = dma.vmem_to_hbm [thread:$0]  %s1748, 16, %s19, [#allocation4]
    $region81: #{tpu_custom_call.1} parent=1 // pred_fallthru
      _
    // Predicated region
    $region82: #{tpu_custom_call.1} parent=1 // pred_check
      _
    $region83: #{tpu_custom_call.1} parent=1 // pred_check_branch
      %1752 = sbr.rel (0) target = $region85
    $region84: #{tpu_custom_call.1} parent=1 // pred_region
      %1753 = dma.done [#allocation4], 16
    $region85: #{tpu_custom_call.1} parent=1 // pred_fallthru
      _
    %1754 = vsyncpa [#allocation4], 1

</llo_original>
